<compile_context>
chip_gen: v5e
topology: v5e:2x2
jax: 0.10.0
libtpu: 0.0.40
codegen_flags: <defaults>
</compile_context>

<pallas_src>
import jax
import jax.numpy as jnp
from jax.experimental import pallas as pl
from jax.experimental.pallas import tpu as pltpu

LN_EPS = 1e-5  # torch.nn.LayerNorm default


def _mlp_ln_kernel(x_ref, w1_ref, w2_ref, pars_ref, o_ref):
    """Fused LayerNorm( W2 @ silu(W1 @ x + b1) + b2 ) on one row tile.

    x_ref    : (tm, din) input row tile (bf16 preferred; cast below is a no-op then)
    w1_ref   : (din, d) bf16      w2_ref : (d, d) bf16
    pars_ref : (8, d) f32, rows 0..3 = b1, b2, gamma, beta
    o_ref    : (tm, d) output tile (bf16)
    """
    x = x_ref[...].astype(jnp.bfloat16)

    b1 = pars_ref[0:1, :]
    b2 = pars_ref[1:2, :]
    gamma = pars_ref[2:3, :]
    beta = pars_ref[3:4, :]

    # Linear 1 + activation (bf16 operands -> MXU, f32 accumulate; silu -> VPU/EUP)
    h = jnp.dot(x, w1_ref[...], preferred_element_type=jnp.float32) + b1
    h = jax.nn.silu(h)

    # Linear 2
    y = jnp.dot(h.astype(jnp.bfloat16), w2_ref[...],
                preferred_element_type=jnp.float32) + b2

    # LayerNorm over the feature (last) axis, statistics in f32
    mean = jnp.mean(y, axis=-1, keepdims=True)
    cen = y - mean
    var = jnp.mean(cen * cen, axis=-1, keepdims=True)
    yhat = cen * jax.lax.rsqrt(var + LN_EPS)
    o_ref[...] = (yhat * gamma + beta).astype(o_ref.dtype)


def _choose_tm(n_rows, tm_max=4096, target_tiles=4):
    """Pick the row tile.

    - tiny inputs: one full-extent block (always legal, avoids (16,128) bf16 tile
      constraints for odd row counts);
    - otherwise: aim for >= `target_tiles` tiles (>= 2 per TensorCore on v7x so
      DMA/compute overlap), multiple of 16 (bf16 sublane packing), capped at
      `tm_max` so each grid step moves >~1 MiB and the ~0.35 us fixed step cost
      is amortized.
    """
    if n_rows <= 256:
        return n_rows
    tm = -(-n_rows // target_tiles)          # ceil(n / target_tiles)
    tm = ((tm + 15) // 16) * 16              # multiple of 16
    return max(16, min(tm_max, tm))


def mlp_layernorm(x, params, *, tm=None, out_dtype=jnp.bfloat16):
    """Apply fused MLP+LayerNorm to one [n, din] tensor with one padless pallas_call."""
    n, din = x.shape
    d = params["w1"].shape[1]
    if tm is None:
        tm = _choose_tm(n)

    return pl.pallas_call(
        _mlp_ln_kernel,
        out_shape=jax.ShapeDtypeStruct((n, d), out_dtype),
        grid_spec=pltpu.PrefetchScalarGridSpec(
            num_scalar_prefetch=0,
            grid=(pl.cdiv(n, tm),),
            in_specs=[
                pl.BlockSpec((tm, din), lambda i: (i, 0)),   # x row tile
                pl.BlockSpec((din, d), lambda i: (0, 0)),    # W1 (resident)
                pl.BlockSpec((d, d), lambda i: (0, 0)),      # W2 (resident)
                pl.BlockSpec((8, d), lambda i: (0, 0)),      # b1/b2/gamma/beta slab
            ],
            out_specs=pl.BlockSpec((tm, d), lambda i: (i, 0)),
        ),
        compiler_params=pltpu.CompilerParams(
            dimension_semantics=("parallel",),
            vmem_limit_bytes=32 * 1024 * 1024,
        ),
    )(x, params["w1"], params["w2"], params["pars"])


def init_embed_params(key, din, d):
    """Synthetic params for MLP([din, d, d]) + LayerNorm(d).

    Weights stored bf16 (MXU operands); biases / LN affine stay f32, packed into
    one (8, d) slab: rows 0..3 = b1, b2, gamma, beta (rows 4..7 zero pad).
    """
    k1, k2, k3, k4 = jax.random.split(key, 4)
    s1 = 1.0 / jnp.sqrt(jnp.float32(din))
    s2 = 1.0 / jnp.sqrt(jnp.float32(d))
    pars = jnp.zeros((8, d), jnp.float32)
    pars = pars.at[0].set(jax.random.uniform(k3, (d,), jnp.float32, -s1, s1))  # b1
    pars = pars.at[1].set(jax.random.uniform(k4, (d,), jnp.float32, -s2, s2))  # b2
    pars = pars.at[2].set(jnp.ones((d,), jnp.float32))                         # gamma
    # row 3 (beta) stays zero
    return {
        "w1": jax.random.uniform(k1, (din, d), jnp.float32, -s1, s1).astype(jnp.bfloat16),
        "w2": jax.random.uniform(k2, (d, d), jnp.float32, -s2, s2).astype(jnp.bfloat16),
        "pars": pars,
    }


@jax.jit
def encoder_generic_forward(x_atm, x_bnd, x_ang, params_g, params_a, params_e):
    """Atomic_Graph_Data branch of Encoder_generic.forward.

    Inputs are cast to bf16 once here (no-op if the producer already supplies
    bf16) so the kernel's HBM read stream is half the f32 size. Outputs are bf16
    for the same reason (downstream ALIGNN conv layers consume bf16).
    """
    x_atm = x_atm.astype(jnp.bfloat16)
    x_bnd = x_bnd.astype(jnp.bfloat16)
    x_ang = x_ang.astype(jnp.bfloat16)
    h_atm = mlp_layernorm(x_atm, params_g)
    h_bnd = mlp_layernorm(x_bnd, params_a)
    h_ang = mlp_layernorm(x_ang, params_e)
    return h_atm, h_bnd, h_ang


def _ref_forward(x, p):
    """Plain-JAX reference mirroring the kernel's precision policy (f32 result)."""
    b1, b2, gamma, beta = p["pars"][0], p["pars"][1], p["pars"][2], p["pars"][3]
    h = jnp.dot(x.astype(jnp.bfloat16), p["w1"],
                preferred_element_type=jnp.float32) + b1
    h = jax.nn.silu(h)
    y = jnp.dot(h.astype(jnp.bfloat16), p["w2"],
                preferred_element_type=jnp.float32) + b2
    mu = y.mean(-1, keepdims=True)
    var = ((y - mu) ** 2).mean(-1, keepdims=True)
    return (y - mu) * jax.lax.rsqrt(var + LN_EPS) * gamma + beta


if __name__ == "__main__":
    key = jax.random.PRNGKey(0)
    dim = 128         # module default self.dim (lane-dense: multiple of 128)
    g_node_len = 16   # len(data.x_atm[0])
    n_atm, n_bnd, n_ang = 16, 32, 24

    k_x, k_b, k_a, k_pg, k_pa, k_pe = jax.random.split(key, 6)
    # Producer supplies bf16 features (kernel is HBM-bound; f32 is also accepted).
    x_atm = jax.random.normal(k_x, (n_atm, g_node_len), jnp.float32).astype(jnp.bfloat16)
    x_bnd = jax.random.normal(k_b, (n_bnd, dim), jnp.float32).astype(jnp.bfloat16)
    x_ang = jax.random.normal(k_a, (n_ang, dim), jnp.float32).astype(jnp.bfloat16)

    params_g = init_embed_params(k_pg, g_node_len, dim)  # embed_g_node
    params_a = init_embed_params(k_pa, dim, dim)         # embed_a_node
    params_e = init_embed_params(k_pe, dim, dim)         # embed_a_edge

    h_atm, h_bnd, h_ang = encoder_generic_forward(
        x_atm, x_bnd, x_ang, params_g, params_a, params_e)
    jax.block_until_ready((h_atm, h_bnd, h_ang))

    # silent correctness check against a plain-JAX reference (same precision policy;
    # kernel output is bf16, so tolerance covers the final bf16 rounding)
    for out, x, p in ((h_atm, x_atm, params_g),
                      (h_bnd, x_bnd, params_a),
                      (h_ang, x_ang, params_e)):
        ref = _ref_forward(x, p)
        assert out.shape == ref.shape
        assert out.dtype == jnp.bfloat16
        assert jnp.max(jnp.abs(out.astype(jnp.float32) - ref)) < 3e-2

    print("KERNEL_OK")
</pallas_src>

<mosaic_0001>
module attributes {stable_mosaic.version = 11 : i64} {
  func.func @_mlp_ln_kernel(%arg0: i32, %arg1: memref<16x16xbf16, #tpu.memory_space<vmem>>, %arg2: memref<16x128xbf16, #tpu.memory_space<vmem>>, %arg3: memref<128x128xbf16, #tpu.memory_space<vmem>>, %arg4: memref<8x128xf32, #tpu.memory_space<vmem>>, %arg5: memref<16x128xbf16, #tpu.memory_space<vmem>>) attributes {dimension_semantics = [#tpu.dimension_semantics<parallel>], iteration_bounds = array<i64: 1>, scalar_prefetch = 0 : i64, scratch_operands = 0 : i64, tpu.core_type = #tpu.core_type<tc>, window_params = [{transform_indices = @transform_0, window_bounds = array<i64: 16, 16>}, {pipeline_mode = #tpu.pipeline_mode<synchronous>, transform_indices = @transform_1, window_bounds = array<i64: 16, 128>}, {pipeline_mode = #tpu.pipeline_mode<synchronous>, transform_indices = @transform_2, window_bounds = array<i64: 128, 128>}, {pipeline_mode = #tpu.pipeline_mode<synchronous>, transform_indices = @transform_3, window_bounds = array<i64: 8, 128>}, {transform_indices = @transform_4, window_bounds = array<i64: 16, 128>}]} {
    %c0 = arith.constant 0 : index
    %c0_0 = arith.constant 0 : index
    %0 = vector.load %arg1[%c0, %c0_0] : memref<16x16xbf16, #tpu.memory_space<vmem>>, vector<16x16xbf16>
    %c0_1 = arith.constant 0 : index
    %c0_2 = arith.constant 0 : index
    %1 = vector.load %arg4[%c0_1, %c0_2] : memref<8x128xf32, #tpu.memory_space<vmem>>, vector<1x128xf32>
    %c1 = arith.constant 1 : index
    %c0_3 = arith.constant 0 : index
    %2 = vector.load %arg4[%c1, %c0_3] : memref<8x128xf32, #tpu.memory_space<vmem>>, vector<1x128xf32>
    %c2 = arith.constant 2 : index
    %c0_4 = arith.constant 0 : index
    %3 = vector.load %arg4[%c2, %c0_4] : memref<8x128xf32, #tpu.memory_space<vmem>>, vector<1x128xf32>
    %c3 = arith.constant 3 : index
    %c0_5 = arith.constant 0 : index
    %4 = vector.load %arg4[%c3, %c0_5] : memref<8x128xf32, #tpu.memory_space<vmem>>, vector<1x128xf32>
    %c0_6 = arith.constant 0 : index
    %c0_7 = arith.constant 0 : index
    %5 = vector.load %arg2[%c0_6, %c0_7] : memref<16x128xbf16, #tpu.memory_space<vmem>>, vector<16x128xbf16>
    %cst = arith.constant dense<0.000000e+00> : vector<16x128xf32>
    %6 = tpu.matmul %0, %5, %cst {dimension_numbers = #tpu.dot_dimension_numbers<[1], [0], [0], [1], [0, 0, 1, 1], [], []>} : vector<16x16xbf16>, vector<16x128xbf16>, vector<16x128xf32> -> vector<16x128xf32>
    %7 = vector.broadcast %1 : vector<1x128xf32> to vector<16x128xf32>
    %8 = arith.addf %6, %7 : vector<16x128xf32>
    %9 = arith.negf %8 : vector<16x128xf32>
    %10 = math.exp %9 : vector<16x128xf32>
    %cst_8 = arith.constant 1.000000e+00 : f32
    %11 = vector.broadcast %cst_8 : f32 to vector<16x128xf32>
    %12 = arith.addf %11, %10 : vector<16x128xf32>
    %13 = arith.divf %11, %12 : vector<16x128xf32>
    %14 = arith.mulf %8, %13 : vector<16x128xf32>
    %15 = arith.truncf %14 : vector<16x128xf32> to vector<16x128xbf16>
    %c0_9 = arith.constant 0 : index
    %c0_10 = arith.constant 0 : index
    %16 = vector.load %arg3[%c0_9, %c0_10] : memref<128x128xbf16, #tpu.memory_space<vmem>>, vector<128x128xbf16>
    %cst_11 = arith.constant dense<0.000000e+00> : vector<16x128xf32>
    %17 = tpu.matmul %15, %16, %cst_11 {dimension_numbers = #tpu.dot_dimension_numbers<[1], [0], [0], [1], [0, 0, 1, 1], [], []>} : vector<16x128xbf16>, vector<128x128xbf16>, vector<16x128xf32> -> vector<16x128xf32>
    %18 = vector.broadcast %2 : vector<1x128xf32> to vector<16x128xf32>
    %19 = arith.addf %17, %18 : vector<16x128xf32>
    %cst_12 = arith.constant dense<0.000000e+00> : vector<16xf32>
    %20 = vector.multi_reduction <add>, %19, %cst_12 [1] : vector<16x128xf32> to vector<16xf32>
    %21 = vector.shape_cast %20 : vector<16xf32> to vector<16x1xf32>
    %cst_13 = arith.constant 1.280000e+02 : f32
    %22 = vector.broadcast %cst_13 : f32 to vector<16x1xf32>
    %23 = arith.divf %21, %22 : vector<16x1xf32>
    %24 = vector.broadcast %23 : vector<16x1xf32> to vector<16x128xf32>
    %25 = arith.subf %19, %24 : vector<16x128xf32>
    %26 = arith.mulf %25, %25 : vector<16x128xf32>
    %cst_14 = arith.constant dense<0.000000e+00> : vector<16xf32>
    %27 = vector.multi_reduction <add>, %26, %cst_14 [1] : vector<16x128xf32> to vector<16xf32>
    %28 = vector.shape_cast %27 : vector<16xf32> to vector<16x1xf32>
    %cst_15 = arith.constant 1.280000e+02 : f32
    %29 = vector.broadcast %cst_15 : f32 to vector<16x1xf32>
    %30 = arith.divf %28, %29 : vector<16x1xf32>
    %cst_16 = arith.constant 9.99999974E-6 : f32
    %31 = vector.broadcast %cst_16 : f32 to vector<16x1xf32>
    %32 = arith.addf %30, %31 : vector<16x1xf32>
    %33 = math.rsqrt %32 : vector<16x1xf32>
    %34 = vector.broadcast %33 : vector<16x1xf32> to vector<16x128xf32>
    %35 = arith.mulf %25, %34 : vector<16x128xf32>
    %36 = vector.broadcast %3 : vector<1x128xf32> to vector<16x128xf32>
    %37 = arith.mulf %35, %36 : vector<16x128xf32>
    %38 = vector.broadcast %4 : vector<1x128xf32> to vector<16x128xf32>
    %39 = arith.addf %37, %38 : vector<16x128xf32>
    %40 = arith.truncf %39 : vector<16x128xf32> to vector<16x128xbf16>
    %c0_17 = arith.constant 0 : index
    %c0_18 = arith.constant 0 : index
    %41 = vector.load %arg5[%c0_17, %c0_18] : memref<16x128xbf16, #tpu.memory_space<vmem>>, vector<16x128xbf16>
    tpu.vector_store %arg5[%c0_17, %c0_18], %40 {strides = array<i32>} : memref<16x128xbf16, #tpu.memory_space<vmem>>, vector<16x128xbf16>,
    return
  }
  func.func @transform_0(%arg0: i32) -> (i32, i32) {
    %c0_i32 = arith.constant 0 : i32
    %c0_i32_0 = arith.constant 0 : i32
    return %arg0, %c0_i32 : i32, i32
  }
  func.func @transform_1(%arg0: i32) -> (i32, i32) {
    %c0_i32 = arith.constant 0 : i32
    %c0_i32_0 = arith.constant 0 : i32
    %c0_i32_1 = arith.constant 0 : i32
    return %c0_i32, %c0_i32_0 : i32, i32
  }
  func.func @transform_2(%arg0: i32) -> (i32, i32) {
    %c0_i32 = arith.constant 0 : i32
    %c0_i32_0 = arith.constant 0 : i32
    %c0_i32_1 = arith.constant 0 : i32
    return %c0_i32, %c0_i32_0 : i32, i32
  }
  func.func @transform_3(%arg0: i32) -> (i32, i32) {
    %c0_i32 = arith.constant 0 : i32
    %c0_i32_0 = arith.constant 0 : i32
    %c0_i32_1 = arith.constant 0 : i32
    return %c0_i32, %c0_i32_0 : i32, i32
  }
  func.func @transform_4(%arg0: i32) -> (i32, i32) {
    %c0_i32 = arith.constant 0 : i32
    %c0_i32_0 = arith.constant 0 : i32
    return %arg0, %c0_i32 : i32, i32
  }
}

module attributes {stable_mosaic.version = 11 : i64} {
  func.func @_mlp_ln_kernel(%arg0: i32, %arg1: memref<24x128xbf16, #tpu.memory_space<vmem>>, %arg2: memref<128x128xbf16, #tpu.memory_space<vmem>>, %arg3: memref<128x128xbf16, #tpu.memory_space<vmem>>, %arg4: memref<8x128xf32, #tpu.memory_space<vmem>>, %arg5: memref<24x128xbf16, #tpu.memory_space<vmem>>) attributes {dimension_semantics = [#tpu.dimension_semantics<parallel>], iteration_bounds = array<i64: 1>, scalar_prefetch = 0 : i64, scratch_operands = 0 : i64, tpu.core_type = #tpu.core_type<tc>, window_params = [{transform_indices = @transform_0, window_bounds = array<i64: 24, 128>}, {pipeline_mode = #tpu.pipeline_mode<synchronous>, transform_indices = @transform_1, window_bounds = array<i64: 128, 128>}, {pipeline_mode = #tpu.pipeline_mode<synchronous>, transform_indices = @transform_2, window_bounds = array<i64: 128, 128>}, {pipeline_mode = #tpu.pipeline_mode<synchronous>, transform_indices = @transform_3, window_bounds = array<i64: 8, 128>}, {transform_indices = @transform_4, window_bounds = array<i64: 24, 128>}]} {
    %c0 = arith.constant 0 : index
    %c0_0 = arith.constant 0 : index
    %0 = vector.load %arg1[%c0, %c0_0] : memref<24x128xbf16, #tpu.memory_space<vmem>>, vector<24x128xbf16>
    %c0_1 = arith.constant 0 : index
    %c0_2 = arith.constant 0 : index
    %1 = vector.load %arg4[%c0_1, %c0_2] : memref<8x128xf32, #tpu.memory_space<vmem>>, vector<1x128xf32>
    %c1 = arith.constant 1 : index
    %c0_3 = arith.constant 0 : index
    %2 = vector.load %arg4[%c1, %c0_3] : memref<8x128xf32, #tpu.memory_space<vmem>>, vector<1x128xf32>
    %c2 = arith.constant 2 : index
    %c0_4 = arith.constant 0 : index
    %3 = vector.load %arg4[%c2, %c0_4] : memref<8x128xf32, #tpu.memory_space<vmem>>, vector<1x128xf32>
    %c3 = arith.constant 3 : index
    %c0_5 = arith.constant 0 : index
    %4 = vector.load %arg4[%c3, %c0_5] : memref<8x128xf32, #tpu.memory_space<vmem>>, vector<1x128xf32>
    %c0_6 = arith.constant 0 : index
    %c0_7 = arith.constant 0 : index
    %5 = vector.load %arg2[%c0_6, %c0_7] : memref<128x128xbf16, #tpu.memory_space<vmem>>, vector<128x128xbf16>
    %cst = arith.constant dense<0.000000e+00> : vector<24x128xf32>
    %6 = tpu.matmul %0, %5, %cst {dimension_numbers = #tpu.dot_dimension_numbers<[1], [0], [0], [1], [0, 0, 1, 1], [], []>} : vector<24x128xbf16>, vector<128x128xbf16>, vector<24x128xf32> -> vector<24x128xf32>
    %7 = vector.broadcast %1 : vector<1x128xf32> to vector<24x128xf32>
    %8 = arith.addf %6, %7 : vector<24x128xf32>
    %9 = arith.negf %8 : vector<24x128xf32>
    %10 = math.exp %9 : vector<24x128xf32>
    %cst_8 = arith.constant 1.000000e+00 : f32
    %11 = vector.broadcast %cst_8 : f32 to vector<24x128xf32>
    %12 = arith.addf %11, %10 : vector<24x128xf32>
    %13 = arith.divf %11, %12 : vector<24x128xf32>
    %14 = arith.mulf %8, %13 : vector<24x128xf32>
    %15 = arith.truncf %14 : vector<24x128xf32> to vector<24x128xbf16>
    %c0_9 = arith.constant 0 : index
    %c0_10 = arith.constant 0 : index
    %16 = vector.load %arg3[%c0_9, %c0_10] : memref<128x128xbf16, #tpu.memory_space<vmem>>, vector<128x128xbf16>
    %cst_11 = arith.constant dense<0.000000e+00> : vector<24x128xf32>
    %17 = tpu.matmul %15, %16, %cst_11 {dimension_numbers = #tpu.dot_dimension_numbers<[1], [0], [0], [1], [0, 0, 1, 1], [], []>} : vector<24x128xbf16>, vector<128x128xbf16>, vector<24x128xf32> -> vector<24x128xf32>
    %18 = vector.broadcast %2 : vector<1x128xf32> to vector<24x128xf32>
    %19 = arith.addf %17, %18 : vector<24x128xf32>
    %cst_12 = arith.constant dense<0.000000e+00> : vector<24xf32>
    %20 = vector.multi_reduction <add>, %19, %cst_12 [1] : vector<24x128xf32> to vector<24xf32>
    %21 = vector.shape_cast %20 : vector<24xf32> to vector<24x1xf32>
    %cst_13 = arith.constant 1.280000e+02 : f32
    %22 = vector.broadcast %cst_13 : f32 to vector<24x1xf32>
    %23 = arith.divf %21, %22 : vector<24x1xf32>
    %24 = vector.broadcast %23 : vector<24x1xf32> to vector<24x128xf32>
    %25 = arith.subf %19, %24 : vector<24x128xf32>
    %26 = arith.mulf %25, %25 : vector<24x128xf32>
    %cst_14 = arith.constant dense<0.000000e+00> : vector<24xf32>
    %27 = vector.multi_reduction <add>, %26, %cst_14 [1] : vector<24x128xf32> to vector<24xf32>
    %28 = vector.shape_cast %27 : vector<24xf32> to vector<24x1xf32>
    %cst_15 = arith.constant 1.280000e+02 : f32
    %29 = vector.broadcast %cst_15 : f32 to vector<24x1xf32>
    %30 = arith.divf %28, %29 : vector<24x1xf32>
    %cst_16 = arith.constant 9.99999974E-6 : f32
    %31 = vector.broadcast %cst_16 : f32 to vector<24x1xf32>
    %32 = arith.addf %30, %31 : vector<24x1xf32>
    %33 = math.rsqrt %32 : vector<24x1xf32>
    %34 = vector.broadcast %33 : vector<24x1xf32> to vector<24x128xf32>
    %35 = arith.mulf %25, %34 : vector<24x128xf32>
    %36 = vector.broadcast %3 : vector<1x128xf32> to vector<24x128xf32>
    %37 = arith.mulf %35, %36 : vector<24x128xf32>
    %38 = vector.broadcast %4 : vector<1x128xf32> to vector<24x128xf32>
    %39 = arith.addf %37, %38 : vector<24x128xf32>
    %40 = arith.truncf %39 : vector<24x128xf32> to vector<24x128xbf16>
    %c0_17 = arith.constant 0 : index
    %c0_18 = arith.constant 0 : index
    %41 = vector.load %arg5[%c0_17, %c0_18] : memref<24x128xbf16, #tpu.memory_space<vmem>>, vector<24x128xbf16>
    tpu.vector_store %arg5[%c0_17, %c0_18], %40 {strides = array<i32>} : memref<24x128xbf16, #tpu.memory_space<vmem>>, vector<24x128xbf16>,
    return
  }
  func.func @transform_0(%arg0: i32) -> (i32, i32) {
    %c0_i32 = arith.constant 0 : i32
    %c0_i32_0 = arith.constant 0 : i32
    return %arg0, %c0_i32 : i32, i32
  }
  func.func @transform_1(%arg0: i32) -> (i32, i32) {
    %c0_i32 = arith.constant 0 : i32
    %c0_i32_0 = arith.constant 0 : i32
    %c0_i32_1 = arith.constant 0 : i32
    return %c0_i32, %c0_i32_0 : i32, i32
  }
  func.func @transform_2(%arg0: i32) -> (i32, i32) {
    %c0_i32 = arith.constant 0 : i32
    %c0_i32_0 = arith.constant 0 : i32
    %c0_i32_1 = arith.constant 0 : i32
    return %c0_i32, %c0_i32_0 : i32, i32
  }
  func.func @transform_3(%arg0: i32) -> (i32, i32) {
    %c0_i32 = arith.constant 0 : i32
    %c0_i32_0 = arith.constant 0 : i32
    %c0_i32_1 = arith.constant 0 : i32
    return %c0_i32, %c0_i32_0 : i32, i32
  }
  func.func @transform_4(%arg0: i32) -> (i32, i32) {
    %c0_i32 = arith.constant 0 : i32
    %c0_i32_0 = arith.constant 0 : i32
    return %arg0, %c0_i32 : i32, i32
  }
}

module attributes {stable_mosaic.version = 11 : i64} {
  func.func @_mlp_ln_kernel(%arg0: i32, %arg1: memref<32x128xbf16, #tpu.memory_space<vmem>>, %arg2: memref<128x128xbf16, #tpu.memory_space<vmem>>, %arg3: memref<128x128xbf16, #tpu.memory_space<vmem>>, %arg4: memref<8x128xf32, #tpu.memory_space<vmem>>, %arg5: memref<32x128xbf16, #tpu.memory_space<vmem>>) attributes {dimension_semantics = [#tpu.dimension_semantics<parallel>], iteration_bounds = array<i64: 1>, scalar_prefetch = 0 : i64, scratch_operands = 0 : i64, tpu.core_type = #tpu.core_type<tc>, window_params = [{transform_indices = @transform_0, window_bounds = array<i64: 32, 128>}, {pipeline_mode = #tpu.pipeline_mode<synchronous>, transform_indices = @transform_1, window_bounds = array<i64: 128, 128>}, {pipeline_mode = #tpu.pipeline_mode<synchronous>, transform_indices = @transform_2, window_bounds = array<i64: 128, 128>}, {pipeline_mode = #tpu.pipeline_mode<synchronous>, transform_indices = @transform_3, window_bounds = array<i64: 8, 128>}, {transform_indices = @transform_4, window_bounds = array<i64: 32, 128>}]} {
    %c0 = arith.constant 0 : index
    %c0_0 = arith.constant 0 : index
    %0 = vector.load %arg1[%c0, %c0_0] : memref<32x128xbf16, #tpu.memory_space<vmem>>, vector<32x128xbf16>
    %c0_1 = arith.constant 0 : index
    %c0_2 = arith.constant 0 : index
    %1 = vector.load %arg4[%c0_1, %c0_2] : memref<8x128xf32, #tpu.memory_space<vmem>>, vector<1x128xf32>
    %c1 = arith.constant 1 : index
    %c0_3 = arith.constant 0 : index
    %2 = vector.load %arg4[%c1, %c0_3] : memref<8x128xf32, #tpu.memory_space<vmem>>, vector<1x128xf32>
    %c2 = arith.constant 2 : index
    %c0_4 = arith.constant 0 : index
    %3 = vector.load %arg4[%c2, %c0_4] : memref<8x128xf32, #tpu.memory_space<vmem>>, vector<1x128xf32>
    %c3 = arith.constant 3 : index
    %c0_5 = arith.constant 0 : index
    %4 = vector.load %arg4[%c3, %c0_5] : memref<8x128xf32, #tpu.memory_space<vmem>>, vector<1x128xf32>
    %c0_6 = arith.constant 0 : index
    %c0_7 = arith.constant 0 : index
    %5 = vector.load %arg2[%c0_6, %c0_7] : memref<128x128xbf16, #tpu.memory_space<vmem>>, vector<128x128xbf16>
    %cst = arith.constant dense<0.000000e+00> : vector<32x128xf32>
    %6 = tpu.matmul %0, %5, %cst {dimension_numbers = #tpu.dot_dimension_numbers<[1], [0], [0], [1], [0, 0, 1, 1], [], []>} : vector<32x128xbf16>, vector<128x128xbf16>, vector<32x128xf32> -> vector<32x128xf32>
    %7 = vector.broadcast %1 : vector<1x128xf32> to vector<32x128xf32>
    %8 = arith.addf %6, %7 : vector<32x128xf32>
    %9 = arith.negf %8 : vector<32x128xf32>
    %10 = math.exp %9 : vector<32x128xf32>
    %cst_8 = arith.constant 1.000000e+00 : f32
    %11 = vector.broadcast %cst_8 : f32 to vector<32x128xf32>
    %12 = arith.addf %11, %10 : vector<32x128xf32>
    %13 = arith.divf %11, %12 : vector<32x128xf32>
    %14 = arith.mulf %8, %13 : vector<32x128xf32>
    %15 = arith.truncf %14 : vector<32x128xf32> to vector<32x128xbf16>
    %c0_9 = arith.constant 0 : index
    %c0_10 = arith.constant 0 : index
    %16 = vector.load %arg3[%c0_9, %c0_10] : memref<128x128xbf16, #tpu.memory_space<vmem>>, vector<128x128xbf16>
    %cst_11 = arith.constant dense<0.000000e+00> : vector<32x128xf32>
    %17 = tpu.matmul %15, %16, %cst_11 {dimension_numbers = #tpu.dot_dimension_numbers<[1], [0], [0], [1], [0, 0, 1, 1], [], []>} : vector<32x128xbf16>, vector<128x128xbf16>, vector<32x128xf32> -> vector<32x128xf32>
    %18 = vector.broadcast %2 : vector<1x128xf32> to vector<32x128xf32>
    %19 = arith.addf %17, %18 : vector<32x128xf32>
    %cst_12 = arith.constant dense<0.000000e+00> : vector<32xf32>
    %20 = vector.multi_reduction <add>, %19, %cst_12 [1] : vector<32x128xf32> to vector<32xf32>
    %21 = vector.shape_cast %20 : vector<32xf32> to vector<32x1xf32>
    %cst_13 = arith.constant 1.280000e+02 : f32
    %22 = vector.broadcast %cst_13 : f32 to vector<32x1xf32>
    %23 = arith.divf %21, %22 : vector<32x1xf32>
    %24 = vector.broadcast %23 : vector<32x1xf32> to vector<32x128xf32>
    %25 = arith.subf %19, %24 : vector<32x128xf32>
    %26 = arith.mulf %25, %25 : vector<32x128xf32>
    %cst_14 = arith.constant dense<0.000000e+00> : vector<32xf32>
    %27 = vector.multi_reduction <add>, %26, %cst_14 [1] : vector<32x128xf32> to vector<32xf32>
    %28 = vector.shape_cast %27 : vector<32xf32> to vector<32x1xf32>
    %cst_15 = arith.constant 1.280000e+02 : f32
    %29 = vector.broadcast %cst_15 : f32 to vector<32x1xf32>
    %30 = arith.divf %28, %29 : vector<32x1xf32>
    %cst_16 = arith.constant 9.99999974E-6 : f32
    %31 = vector.broadcast %cst_16 : f32 to vector<32x1xf32>
    %32 = arith.addf %30, %31 : vector<32x1xf32>
    %33 = math.rsqrt %32 : vector<32x1xf32>
    %34 = vector.broadcast %33 : vector<32x1xf32> to vector<32x128xf32>
    %35 = arith.mulf %25, %34 : vector<32x128xf32>
    %36 = vector.broadcast %3 : vector<1x128xf32> to vector<32x128xf32>
    %37 = arith.mulf %35, %36 : vector<32x128xf32>
    %38 = vector.broadcast %4 : vector<1x128xf32> to vector<32x128xf32>
    %39 = arith.addf %37, %38 : vector<32x128xf32>
    %40 = arith.truncf %39 : vector<32x128xf32> to vector<32x128xbf16>
    %c0_17 = arith.constant 0 : index
    %c0_18 = arith.constant 0 : index
    %41 = vector.load %arg5[%c0_17, %c0_18] : memref<32x128xbf16, #tpu.memory_space<vmem>>, vector<32x128xbf16>
    tpu.vector_store %arg5[%c0_17, %c0_18], %40 {strides = array<i32>} : memref<32x128xbf16, #tpu.memory_space<vmem>>, vector<32x128xbf16>,
    return
  }
  func.func @transform_0(%arg0: i32) -> (i32, i32) {
    %c0_i32 = arith.constant 0 : i32
    %c0_i32_0 = arith.constant 0 : i32
    return %arg0, %c0_i32 : i32, i32
  }
  func.func @transform_1(%arg0: i32) -> (i32, i32) {
    %c0_i32 = arith.constant 0 : i32
    %c0_i32_0 = arith.constant 0 : i32
    %c0_i32_1 = arith.constant 0 : i32
    return %c0_i32, %c0_i32_0 : i32, i32
  }
  func.func @transform_2(%arg0: i32) -> (i32, i32) {
    %c0_i32 = arith.constant 0 : i32
    %c0_i32_0 = arith.constant 0 : i32
    %c0_i32_1 = arith.constant 0 : i32
    return %c0_i32, %c0_i32_0 : i32, i32
  }
  func.func @transform_3(%arg0: i32) -> (i32, i32) {
    %c0_i32 = arith.constant 0 : i32
    %c0_i32_0 = arith.constant 0 : i32
    %c0_i32_1 = arith.constant 0 : i32
    return %c0_i32, %c0_i32_0 : i32, i32
  }
  func.func @transform_4(%arg0: i32) -> (i32, i32) {
    %c0_i32 = arith.constant 0 : i32
    %c0_i32_0 = arith.constant 0 : i32
    return %arg0, %c0_i32 : i32, i32
  }
}

</mosaic_0001>

<llo_original>
// kernel: encoder_generic_forward.3
$region0: #{encoder_generic_forward.3}
  #allocation0 [shape = 'u32[]', space=smem, size = 0x4, offset = 0x4, fixed_abs, tag = 'smem constant byte address 0x4 - core index']
  #allocation1 [shape = 'u32[72,128]{1,0:T(1,128)}', space=vmem, size = 0x9000, scoped, tag = 'internal scratch']
  %s0 = inlined_call_operand.hbm [shape: bf16[16,16], index: 0, kind: input, shape index: {}]
  %s1 = inlined_call_operand.hbm [shape: bf16[16,128], index: 1, kind: input, shape index: {}]
  %s2 = inlined_call_operand.hbm [shape: bf16[128,128], index: 2, kind: input, shape index: {}]
  %s3 = inlined_call_operand.hbm [shape: f32[8,128], index: 3, kind: input, shape index: {}]
  %s4 = inlined_call_operand.hbm [shape: bf16[16,128], index: 4, kind: output, shape index: {}]
  %s5 = sld [smem:[#allocation0]]
  $region42: #{encoder_generic_forward.3} parent=0
    _
  %s7 = ssub.s32 1, %s5
  %s8 = scalar_select 0, %s7, %s5
  $region1: #{encoder_generic_forward.3} parent=0
    #allocation2 [shape = 'u8[4096]{0}', space=vmem, size = 0x1000, scoped, tag = 'input window, operand 0, single buffered']
    #allocation3 [shape = 's32[1]{0}', space=sflag, size = 0x4, scoped, tag = 'scoped memory for encoder_generic_forward.3']
    #allocation4 [shape = 's32[1]{0}', space=sflag, size = 0x4, scoped, tag = 'scoped memory for encoder_generic_forward.3']
    #allocation5 [shape = 'u8[4096]{0}', space=vmem, size = 0x1000, scoped, tag = 'input window, operand 1, single buffered']
    #allocation6 [shape = 's32[1]{0}', space=sflag, size = 0x4, scoped, tag = 'scoped memory for encoder_generic_forward.3']
    #allocation7 [shape = 'u8[32768]{0}', space=vmem, size = 0x8000, scoped, tag = 'input window, operand 2, single buffered']
    #allocation8 [shape = 'u8[4096]{0}', space=vmem, size = 0x1000, scoped, tag = 'input window, operand 3, single buffered']
    #allocation9 [shape = 's32[1]{0}', space=sflag, size = 0x4, scoped, tag = 'scoped memory for encoder_generic_forward.3']
    #allocation10 [shape = 'u8[4096]{0}', space=vmem, size = 0x1000, scoped, tag = 'output window, operand 0, single buffered']
    %9 = vsyncpa [#allocation3], 0
    %10 = vsyncpa [#allocation6], 0
    %11 = vsyncpa [#allocation9], 0
    %12 = vsyncpa [#allocation4], 0
    // Predicated region
    $region2: #{encoder_generic_forward.3} parent=1 // pred_check
      _
    $region3: #{encoder_generic_forward.3} parent=1 // pred_check_branch
      %14 = sbr.rel (0) target = $region5
    $region4: #{encoder_generic_forward.3} parent=1 // pred_region
      %16 = vsyncadd [#allocation3], 0
      %s17 = sshll.u32 %s0, 4
      %s18 = int_to_ptr.hbm [resolvable:$true] %s17
      %s19 = sshll.u32 [#allocation2], 4
      %s20 = int_to_ptr.vmem [resolvable:$true] %s19
      %25 = dma.hbm_to_vmem [thread:$0]  %s18, 128, %s20, [#allocation3], 64, 64, 4
    $region5: #{encoder_generic_forward.3} parent=1 // pred_fallthru
      _
    // Predicated region
    $region6: #{encoder_generic_forward.3} parent=1 // pred_check
      _
    $region7: #{encoder_generic_forward.3} parent=1 // pred_check_branch
      %27 = sbr.rel (0) target = $region9
    $region8: #{encoder_generic_forward.3} parent=1 // pred_region
      %29 = vsyncadd [#allocation6], 0
      %s30 = sshll.u32 %s1, 4
      %s31 = int_to_ptr.hbm [resolvable:$true] %s30
      %s32 = sshll.u32 [#allocation5], 4
      %s33 = int_to_ptr.vmem [resolvable:$true] %s32
      %38 = dma.hbm_to_vmem [thread:$0]  %s31, 128, %s33, [#allocation6], 64, 64, 4
    $region9: #{encoder_generic_forward.3} parent=1 // pred_fallthru
      _
    // Predicated region
    $region10: #{encoder_generic_forward.3} parent=1 // pred_check
      _
    $region11: #{encoder_generic_forward.3} parent=1 // pred_check_branch
      %40 = sbr.rel (0) target = $region13
    $region12: #{encoder_generic_forward.3} parent=1 // pred_region
      %42 = vsyncadd [#allocation6], 0
      %s43 = sshll.u32 %s2, 4
      %s44 = int_to_ptr.hbm [resolvable:$true] %s43
      %s45 = sshll.u32 [#allocation7], 4
      %s46 = int_to_ptr.vmem [resolvable:$true] %s45
      %51 = dma.hbm_to_vmem [thread:$0]  %s44, 1024, %s46, [#allocation6], 64, 64, 4
    $region13: #{encoder_generic_forward.3} parent=1 // pred_fallthru
      _
    // Predicated region
    $region14: #{encoder_generic_forward.3} parent=1 // pred_check
      _
    $region15: #{encoder_generic_forward.3} parent=1 // pred_check_branch
      %53 = sbr.rel (0) target = $region17
    $region16: #{encoder_generic_forward.3} parent=1 // pred_region
      %55 = vsyncadd [#allocation9], 0
      %s57 = sshll.u32 %s3, 4
      %s58 = int_to_ptr.hbm [resolvable:$true] %s57
      %s59 = sshll.u32 [#allocation8], 4
      %s60 = int_to_ptr.vmem [resolvable:$true] %s59
      %62 = dma.hbm_to_vmem [thread:$0]  %s58, 128, %s60, [#allocation9]
    $region17: #{encoder_generic_forward.3} parent=1 // pred_fallthru
      _
    // Predicated region
    $region18: #{encoder_generic_forward.3} parent=1 // pred_check
      _
    $region19: #{encoder_generic_forward.3} parent=1 // pred_check_branch
      %64 = sbr.rel (0) target = $region21
    $region20: #{encoder_generic_forward.3} parent=1 // pred_region
      %66 = dma.done [#allocation3], 128
    $region21: #{encoder_generic_forward.3} parent=1 // pred_fallthru
      _
    // Predicated region
    $region22: #{encoder_generic_forward.3} parent=1 // pred_check
      _
    $region23: #{encoder_generic_forward.3} parent=1 // pred_check_branch
      %68 = sbr.rel (0) target = $region25
    $region24: #{encoder_generic_forward.3} parent=1 // pred_region
      %70 = dma.done [#allocation6], 128
    $region25: #{encoder_generic_forward.3} parent=1 // pred_fallthru
      _
    // Predicated region
    $region26: #{encoder_generic_forward.3} parent=1 // pred_check
      _
    $region27: #{encoder_generic_forward.3} parent=1 // pred_check_branch
      %72 = sbr.rel (0) target = $region29
    $region28: #{encoder_generic_forward.3} parent=1 // pred_region
      %74 = dma.done [#allocation6], 1024
    $region29: #{encoder_generic_forward.3} parent=1 // pred_fallthru
      _
    // Predicated region
    $region30: #{encoder_generic_forward.3} parent=1 // pred_check
      _
    $region31: #{encoder_generic_forward.3} parent=1 // pred_check_branch
      %76 = sbr.rel (0) target = $region33
    $region32: #{encoder_generic_forward.3} parent=1 // pred_region
      %78 = dma.done [#allocation9], 128
    $region33: #{encoder_generic_forward.3} parent=1 // pred_fallthru
      _
    %v80 = vld [vmem:[#allocation2] sm:$0xf]
    %v81 = vld [vmem:[#allocation2 + $0x4] sm:$0xf]
    %v82 = vld [vmem:[#allocation8] sm:$0x1]
    %v83 = vld [vmem:[#allocation8 + $0x1] sm:$0x1]
    %v84 = vld [vmem:[#allocation8 + $0x2] sm:$0x1]
    %v85 = vld [vmem:[#allocation8 + $0x3] sm:$0x1]
    %v86 = vld [vmem:[#allocation5] sm:$0xf]
    %v87 = vld [vmem:[#allocation5 + $0x4] sm:$0xf]
    %v88 = vperm.slane %v82, 0
    %v91 = vunpack.c.l.b16 %v80
    %v92 = vunpack.c.l.b16 %v81
    %v93 = vpack.c.b16 %v92, %v91
    %v96 = vunpack.c.l.b16 %v86
    %v97 = vunpack.c.l.b16 %v87
    %v98 = vpack.c.b16 %v97, %v96
    %vm100 = vcmask 130048
    %v102 = vsel %vm100, %v93, 0
    %104 = vmatpush.bf16.msra.mxu0 0
    %105 = vmatpush.bf16.msra.mxu0 0
    %106 = vmatpush.bf16.msra.mxu0 0
    %107 = vmatpush.bf16.msra.mxu0 0
    %108 = vmatpush.bf16.msra.mxu0 0
    %109 = vmatpush.bf16.msra.mxu0 0
    %110 = vmatpush.bf16.msra.mxu0 0
    %111 = vmatpush.bf16.msra.mxu0 %v98
    %112 = vmatmul.bf16.gmra.mxu0 %v102
    %v113 = vpop.f32.mrf.mxu0
    %v114 = vadd.f32 %v88, %v113
    %v115 = vpop.f32.mrf.mxu0
    %v116 = vadd.f32 %v88, %v115
    %117 = vdwg.mxu0
    %v118 = vxor.u32 %v114, 2147483648
    %v119 = vxor.u32 %v116, 2147483648
    %v120 = vmul.f32 %v118, 1.442695
    %v121 = vpow.pop %v120
    %v122 = vmul.f32 %v119, 1.442695
    %v123 = vpow.pop %v122
    %v124 = vadd.f32 %v121, 1.0
    %v125 = vadd.f32 %v123, 1.0
    %v126 = vrcp.pop %v124
    %v127 = vmul.f32 %v124, %v126
    %v128 = vsub.f32 1.0, %v127
    %v129 = vmul.f32 %v126, %v128
    %v130 = vadd.f32 %v126, %v129
    %vm131 = vweird.f32 %v124
    %vm132 = vweird.f32 %v126
    %vm133 = vmor %vm131, %vm132
    %v134 = vsel %vm133, %v126, %v130
    %v135 = vand.u32 2147483647, %v124
    %vm136 = vcmp.eq.f32.partialorder %v135, 8.507059e+37
    %v137 = vand.u32 %v124, 2147483648
    %v138 = vor.u32 1.1754944e-38, %v137
    %v139 = vsel %vm136, %v138, %v134
    %v140 = vmul.f32 1.0, %v139
    %v141 = vrcp.pop %v125
    %v142 = vmul.f32 %v125, %v141
    %v143 = vsub.f32 1.0, %v142
    %v144 = vmul.f32 %v141, %v143
    %v145 = vadd.f32 %v141, %v144
    %vm146 = vweird.f32 %v125
    %vm147 = vweird.f32 %v141
    %vm148 = vmor %vm146, %vm147
    %v149 = vsel %vm148, %v141, %v145
    %v150 = vand.u32 2147483647, %v125
    %vm151 = vcmp.eq.f32.partialorder %v150, 8.507059e+37
    %v152 = vand.u32 %v125, 2147483648
    %v153 = vor.u32 1.1754944e-38, %v152
    %v154 = vsel %vm151, %v153, %v149
    %v155 = vmul.f32 1.0, %v154
    %v156 = vmul.f32 %v114, %v140
    %v157 = vmul.f32 %v116, %v155
    %v158 = vpack.c.bf16 %v157, %v156
    %v159 = vld [vmem:[#allocation7] sm:$0xf]
    %v160 = vld [vmem:[#allocation7 + $0x4] sm:$0xf]
    %v161 = vld [vmem:[#allocation7 + $0x8] sm:$0xf]
    %v162 = vld [vmem:[#allocation7 + $0xc] sm:$0xf]
    %v163 = vld [vmem:[#allocation7 + $0x10] sm:$0xf]
    %v164 = vld [vmem:[#allocation7 + $0x14] sm:$0xf]
    %v165 = vld [vmem:[#allocation7 + $0x18] sm:$0xf]
    %v166 = vld [vmem:[#allocation7 + $0x1c] sm:$0xf]
    %v167 = vld [vmem:[#allocation7 + $0x20] sm:$0xf]
    %v168 = vld [vmem:[#allocation7 + $0x24] sm:$0xf]
    %v169 = vld [vmem:[#allocation7 + $0x28] sm:$0xf]
    %v170 = vld [vmem:[#allocation7 + $0x2c] sm:$0xf]
    %v171 = vld [vmem:[#allocation7 + $0x30] sm:$0xf]
    %v172 = vld [vmem:[#allocation7 + $0x34] sm:$0xf]
    %v173 = vld [vmem:[#allocation7 + $0x38] sm:$0xf]
    %v174 = vld [vmem:[#allocation7 + $0x3c] sm:$0xf]
    %v175 = vperm.slane %v83, 0
    %v192 = vunpack.c.l.b16 %v159
    %v193 = vunpack.c.l.b16 %v160
    %v194 = vunpack.c.l.b16 %v161
    %v195 = vunpack.c.l.b16 %v162
    %v196 = vunpack.c.l.b16 %v163
    %v197 = vunpack.c.l.b16 %v164
    %v198 = vunpack.c.l.b16 %v165
    %v199 = vunpack.c.l.b16 %v166
    %v200 = vunpack.c.l.b16 %v167
    %v201 = vunpack.c.l.b16 %v168
    %v202 = vunpack.c.l.b16 %v169
    %v203 = vunpack.c.l.b16 %v170
    %v204 = vunpack.c.l.b16 %v171
    %v205 = vunpack.c.l.b16 %v172
    %v206 = vunpack.c.l.b16 %v173
    %v207 = vunpack.c.l.b16 %v174
    %v208 = vpack.c.b16 %v193, %v192
    %v209 = vpack.c.b16 %v195, %v194
    %v210 = vpack.c.b16 %v197, %v196
    %v211 = vpack.c.b16 %v199, %v198
    %v212 = vpack.c.b16 %v201, %v200
    %v213 = vpack.c.b16 %v203, %v202
    %v214 = vpack.c.b16 %v205, %v204
    %v215 = vpack.c.b16 %v207, %v206
    %224 = vmatpush.bf16.msra.mxu0 %v215
    %225 = vmatpush.bf16.msra.mxu0 %v214
    %226 = vmatpush.bf16.msra.mxu0 %v213
    %227 = vmatpush.bf16.msra.mxu0 %v212
    %228 = vmatpush.bf16.msra.mxu0 %v211
    %229 = vmatpush.bf16.msra.mxu0 %v210
    %230 = vmatpush.bf16.msra.mxu0 %v209
    %231 = vmatpush.bf16.msra.mxu0 %v208
    %232 = vmatmul.bf16.gmra.mxu0 %v158
    %v233 = vpop.f32.mrf.mxu0
    %v234 = vadd.f32 %v175, %v233
    %v235 = vpop.f32.mrf.mxu0
    %v236 = vadd.f32 %v175, %v235
    %237 = vdwg.mxu0
    %238 = vadd.xlane.f32.xlu0 %v234
    %v239 = vpop.xlane.xlu0 %238
    %240 = vadd.xlane.f32.xlu0 %v236
    %v241 = vpop.xlane.xlu0 %240
    %v242 = vrcp.pop 128.0
    %v243 = vmul.f32 128.0, %v242
    %v244 = vsub.f32 1.0, %v243
    %v245 = vmul.f32 %v242, %v244
    %v246 = vadd.f32 %v242, %v245
    %vm247 = vweird.f32 %v242
    %v248 = vsel %vm247, %v242, %v246
    %v249 = vmul.f32 %v239, %v248
    %v250 = vmul.f32 %v241, %v248
    %v251 = vsub.f32 %v234, %v249
    %v252 = vsub.f32 %v236, %v250
    %v253 = vmul.f32 %v251, %v251
    %v254 = vmul.f32 %v252, %v252
    %255 = vadd.xlane.f32.xlu0 %v253
    %v256 = vpop.xlane.xlu0 %255
    %257 = vadd.xlane.f32.xlu0 %v254
    %v258 = vpop.xlane.xlu0 %257
    %v259 = vmul.f32 %v256, %v248
    %v260 = vmul.f32 %v258, %v248
    %v261 = vadd.f32 %v259, 1e-05
    %v262 = vadd.f32 %v260, 1e-05
    %v263 = vrsqrt.pop %v261
    %v264 = vmul.f32 %v263, %v261
    %v265 = vmul.f32 %v264, %v263
    %v266 = vmul.f32 0.5, %v265
    %v267 = vsub.f32 1.5, %v266
    %v268 = vmul.f32 %v263, %v267
    %vm269 = vweird.f32 %v261
    %vm270 = vweird.f32 %v263
    %vm271 = vmor %vm269, %vm270
    %v272 = vsel %vm271, %v263, %v268
    %v273 = vrsqrt.pop %v262
    %v274 = vmul.f32 %v273, %v262
    %v275 = vmul.f32 %v274, %v273
    %v276 = vmul.f32 0.5, %v275
    %v277 = vsub.f32 1.5, %v276
    %v278 = vmul.f32 %v273, %v277
    %vm279 = vweird.f32 %v262
    %vm280 = vweird.f32 %v273
    %vm281 = vmor %vm279, %vm280
    %v282 = vsel %vm281, %v273, %v278
    %v283 = vmul.f32 %v251, %v272
    %v284 = vmul.f32 %v252, %v282
    %v285 = vperm.slane %v84, 0
    %v286 = vmul.f32 %v283, %v285
    %v287 = vmul.f32 %v284, %v285
    %v288 = vperm.slane %v85, 0
    %v289 = vadd.f32 %v286, %v288
    %v290 = vadd.f32 %v287, %v288
    %v291 = vpack.c.bf16 %v289, %v289
    %v292 = vpack.c.bf16 %v290, %v290
    %293 = vst [vmem:[#allocation10] sm:$0xf] %v291
    %294 = vst [vmem:[#allocation10 + $0x4] sm:$0xf] %v292
    // Predicated region
    $region34: #{encoder_generic_forward.3} parent=1 // pred_check
      _
    $region35: #{encoder_generic_forward.3} parent=1 // pred_check_branch
      %296 = sbr.rel (0) target = $region37
    $region36: #{encoder_generic_forward.3} parent=1 // pred_region
      %298 = vsyncadd [#allocation4], 0
      %s299 = sshll.u32 [#allocation10], 4
      %s300 = int_to_ptr.vmem [resolvable:$true] %s299
      %s301 = sshll.u32 %s4, 4
      %s302 = int_to_ptr.hbm [resolvable:$true] %s301
      %307 = dma.vmem_to_hbm [thread:$0]  %s300, 128, %s302, [#allocation4], 64, 64, 4
    $region37: #{encoder_generic_forward.3} parent=1 // pred_fallthru
      _
    // Predicated region
    $region38: #{encoder_generic_forward.3} parent=1 // pred_check
      _
    $region39: #{encoder_generic_forward.3} parent=1 // pred_check_branch
      %309 = sbr.rel (0) target = $region41
    $region40: #{encoder_generic_forward.3} parent=1 // pred_region
      %311 = dma.done [#allocation4], 128
    $region41: #{encoder_generic_forward.3} parent=1 // pred_fallthru
      _
    %312 = vsyncpa [#allocation3], 1
    %313 = vsyncpa [#allocation6], 1
    %314 = vsyncpa [#allocation9], 1
    %315 = vsyncpa [#allocation4], 1

// kernel: encoder_generic_forward.5
$region0: #{encoder_generic_forward.5}
  #allocation0 [shape = 'u32[]', space=smem, size = 0x4, offset = 0x4, fixed_abs, tag = 'smem constant byte address 0x4 - core index']
  #allocation1 [shape = 'u32[72,128]{1,0:T(1,128)}', space=vmem, size = 0x9000, scoped, tag = 'internal scratch']
  %s0 = inlined_call_operand.hbm [shape: bf16[24,128], index: 0, kind: input, shape index: {}]
  %s1 = inlined_call_operand.hbm [shape: bf16[128,128], index: 1, kind: input, shape index: {}]
  %s2 = inlined_call_operand.hbm [shape: bf16[128,128], index: 2, kind: input, shape index: {}]
  %s3 = inlined_call_operand.vmem [shape: f32[8,128], index: 3, kind: input, shape index: {}]
  %s4 = inlined_call_operand.hbm [shape: bf16[24,128], index: 4, kind: output, shape index: {}]
  %s5 = sld [smem:[#allocation0]]
  $region38: #{encoder_generic_forward.5} parent=0
    _
  %s7 = ssub.s32 1, %s5
  %s8 = scalar_select 0, %s7, %s5
  $region1: #{encoder_generic_forward.5} parent=0
    #allocation2 [shape = 'u8[6144]{0}', space=vmem, size = 0x1800, scoped, tag = 'input window, operand 0, single buffered']
    #allocation3 [shape = 's32[1]{0}', space=sflag, size = 0x4, scoped, tag = 'scoped memory for encoder_generic_forward.5']
    #allocation4 [shape = 's32[1]{0}', space=sflag, size = 0x4, scoped, tag = 'scoped memory for encoder_generic_forward.5']
    #allocation5 [shape = 'u8[32768]{0}', space=vmem, size = 0x8000, scoped, tag = 'input window, operand 1, single buffered']
    #allocation6 [shape = 's32[1]{0}', space=sflag, size = 0x4, scoped, tag = 'scoped memory for encoder_generic_forward.5']
    #allocation7 [shape = 'u8[32768]{0}', space=vmem, size = 0x8000, scoped, tag = 'input window, operand 2, single buffered']
    #allocation8 [shape = 'u8[6144]{0}', space=vmem, size = 0x1800, scoped, tag = 'output window, operand 0, single buffered']
    %9 = vsyncpa [#allocation3], 0
    %10 = vsyncpa [#allocation6], 0
    %11 = vsyncpa [#allocation4], 0
    // Predicated region
    $region2: #{encoder_generic_forward.5} parent=1 // pred_check
      _
    $region3: #{encoder_generic_forward.5} parent=1 // pred_check_branch
      %13 = sbr.rel (0) target = $region5
    $region4: #{encoder_generic_forward.5} parent=1 // pred_region
      %15 = vsyncadd [#allocation3], 0
      %s16 = sshll.u32 %s0, 4
      %s17 = int_to_ptr.hbm [resolvable:$true] %s16
      %s18 = sshll.u32 [#allocation2], 4
      %s19 = int_to_ptr.vmem [resolvable:$true] %s18
      %24 = dma.hbm_to_vmem [thread:$0]  %s17, 192, %s19, [#allocation3], 64, 64, 4
    $region5: #{encoder_generic_forward.5} parent=1 // pred_fallthru
      _
    // Predicated region
    $region6: #{encoder_generic_forward.5} parent=1 // pred_check
      _
    $region7: #{encoder_generic_forward.5} parent=1 // pred_check_branch
      %26 = sbr.rel (0) target = $region9
    $region8: #{encoder_generic_forward.5} parent=1 // pred_region
      %28 = vsyncadd [#allocation6], 0
      %s29 = sshll.u32 %s1, 4
      %s30 = int_to_ptr.hbm [resolvable:$true] %s29
      %s31 = sshll.u32 [#allocation5], 4
      %s32 = int_to_ptr.vmem [resolvable:$true] %s31
      %37 = dma.hbm_to_vmem [thread:$0]  %s30, 1024, %s32, [#allocation6], 64, 64, 4
    $region9: #{encoder_generic_forward.5} parent=1 // pred_fallthru
      _
    // Predicated region
    $region10: #{encoder_generic_forward.5} parent=1 // pred_check
      _
    $region11: #{encoder_generic_forward.5} parent=1 // pred_check_branch
      %39 = sbr.rel (0) target = $region13
    $region12: #{encoder_generic_forward.5} parent=1 // pred_region
      %41 = vsyncadd [#allocation6], 0
      %s42 = sshll.u32 %s2, 4
      %s43 = int_to_ptr.hbm [resolvable:$true] %s42
      %s44 = sshll.u32 [#allocation7], 4
      %s45 = int_to_ptr.vmem [resolvable:$true] %s44
      %50 = dma.hbm_to_vmem [thread:$0]  %s43, 1024, %s45, [#allocation6], 64, 64, 4
    $region13: #{encoder_generic_forward.5} parent=1 // pred_fallthru
      _
    // Predicated region
    $region14: #{encoder_generic_forward.5} parent=1 // pred_check
      _
    $region15: #{encoder_generic_forward.5} parent=1 // pred_check_branch
      %52 = sbr.rel (0) target = $region17
    $region16: #{encoder_generic_forward.5} parent=1 // pred_region
      _
    $region17: #{encoder_generic_forward.5} parent=1 // pred_fallthru
      _
    // Predicated region
    $region18: #{encoder_generic_forward.5} parent=1 // pred_check
      _
    $region19: #{encoder_generic_forward.5} parent=1 // pred_check_branch
      %54 = sbr.rel (0) target = $region21
    $region20: #{encoder_generic_forward.5} parent=1 // pred_region
      %56 = dma.done [#allocation3], 192
    $region21: #{encoder_generic_forward.5} parent=1 // pred_fallthru
      _
    // Predicated region
    $region22: #{encoder_generic_forward.5} parent=1 // pred_check
      _
    $region23: #{encoder_generic_forward.5} parent=1 // pred_check_branch
      %58 = sbr.rel (0) target = $region25
    $region24: #{encoder_generic_forward.5} parent=1 // pred_region
      %60 = dma.done [#allocation6], 1024
    $region25: #{encoder_generic_forward.5} parent=1 // pred_fallthru
      _
    // Predicated region
    $region26: #{encoder_generic_forward.5} parent=1 // pred_check
      _
    $region27: #{encoder_generic_forward.5} parent=1 // pred_check_branch
      %62 = sbr.rel (0) target = $region29
    $region28: #{encoder_generic_forward.5} parent=1 // pred_region
      %64 = dma.done [#allocation6], 1024
    $region29: #{encoder_generic_forward.5} parent=1 // pred_fallthru
      _
    %v65 = vld [vmem:[#allocation2] sm:$0xf]
    %v66 = vld [vmem:[#allocation2 + $0x4] sm:$0xf]
    %v67 = vld [vmem:[#allocation2 + $0x8] sm:$0xf]
    %v68 = vld [vmem:[%s3] sm:$0x1]
    %v69 = vld [vmem:[%s3 + $0x1] sm:$0x1]
    %v70 = vld [vmem:[%s3 + $0x2] sm:$0x1]
    %v71 = vld [vmem:[%s3 + $0x3] sm:$0x1]
    %v72 = vld [vmem:[#allocation5] sm:$0xf]
    %v73 = vld [vmem:[#allocation5 + $0x4] sm:$0xf]
    %v74 = vld [vmem:[#allocation5 + $0x8] sm:$0xf]
    %v75 = vld [vmem:[#allocation5 + $0xc] sm:$0xf]
    %v76 = vld [vmem:[#allocation5 + $0x10] sm:$0xf]
    %v77 = vld [vmem:[#allocation5 + $0x14] sm:$0xf]
    %v78 = vld [vmem:[#allocation5 + $0x18] sm:$0xf]
    %v79 = vld [vmem:[#allocation5 + $0x1c] sm:$0xf]
    %v80 = vld [vmem:[#allocation5 + $0x20] sm:$0xf]
    %v81 = vld [vmem:[#allocation5 + $0x24] sm:$0xf]
    %v82 = vld [vmem:[#allocation5 + $0x28] sm:$0xf]
    %v83 = vld [vmem:[#allocation5 + $0x2c] sm:$0xf]
    %v84 = vld [vmem:[#allocation5 + $0x30] sm:$0xf]
    %v85 = vld [vmem:[#allocation5 + $0x34] sm:$0xf]
    %v86 = vld [vmem:[#allocation5 + $0x38] sm:$0xf]
    %v87 = vld [vmem:[#allocation5 + $0x3c] sm:$0xf]
    %v88 = vperm.slane %v68, 0
    %v92 = vunpack.c.l.b16 %v65
    %v93 = vunpack.c.l.b16 %v66
    %v94 = vunpack.c.l.b16 %v67
    %v95 = vpack.c.b16 %v93, %v92
    %v96 = vpack.c.b16 %v94, %v94
    %v115 = vunpack.c.l.b16 %v72
    %v116 = vunpack.c.l.b16 %v73
    %v117 = vunpack.c.l.b16 %v74
    %v118 = vunpack.c.l.b16 %v75
    %v119 = vunpack.c.l.b16 %v76
    %v120 = vunpack.c.l.b16 %v77
    %v121 = vunpack.c.l.b16 %v78
    %v122 = vunpack.c.l.b16 %v79
    %v123 = vunpack.c.l.b16 %v80
    %v124 = vunpack.c.l.b16 %v81
    %v125 = vunpack.c.l.b16 %v82
    %v126 = vunpack.c.l.b16 %v83
    %v127 = vunpack.c.l.b16 %v84
    %v128 = vunpack.c.l.b16 %v85
    %v129 = vunpack.c.l.b16 %v86
    %v130 = vunpack.c.l.b16 %v87
    %v131 = vpack.c.b16 %v116, %v115
    %v132 = vpack.c.b16 %v118, %v117
    %v133 = vpack.c.b16 %v120, %v119
    %v134 = vpack.c.b16 %v122, %v121
    %v135 = vpack.c.b16 %v124, %v123
    %v136 = vpack.c.b16 %v126, %v125
    %v137 = vpack.c.b16 %v128, %v127
    %v138 = vpack.c.b16 %v130, %v129
    %147 = vmatpush.bf16.msra.mxu0 %v138
    %148 = vmatpush.bf16.msra.mxu0 %v137
    %149 = vmatpush.bf16.msra.mxu0 %v136
    %150 = vmatpush.bf16.msra.mxu0 %v135
    %151 = vmatpush.bf16.msra.mxu0 %v134
    %152 = vmatpush.bf16.msra.mxu0 %v133
    %153 = vmatpush.bf16.msra.mxu0 %v132
    %154 = vmatpush.bf16.msra.mxu0 %v131
    %155 = vmatmul.bf16.gmra.mxu0 %v95
    %v156 = vpop.f32.mrf.mxu0
    %v157 = vadd.f32 %v88, %v156
    %v158 = vpop.f32.mrf.mxu0
    %v159 = vadd.f32 %v88, %v158
    %160 = vmatmul.bf16.gmra.mxu0 %v96
    %v161 = vpop.f32.mrf.mxu0
    %v162 = vadd.f32 %v88, %v161
    %v163 = vpop.f32.mrf.mxu0
    %164 = vdwg.mxu0
    %v165 = vxor.u32 %v157, 2147483648
    %v166 = vxor.u32 %v159, 2147483648
    %v167 = vxor.u32 %v162, 2147483648
    %v168 = vmul.f32 %v165, 1.442695
    %v169 = vpow.pop %v168
    %v170 = vmul.f32 %v166, 1.442695
    %v171 = vpow.pop %v170
    %v172 = vmul.f32 %v167, 1.442695
    %v173 = vpow.pop %v172
    %v174 = vadd.f32 %v169, 1.0
    %v175 = vadd.f32 %v171, 1.0
    %v176 = vadd.f32 %v173, 1.0
    %v177 = vrcp.pop %v174
    %v178 = vmul.f32 %v174, %v177
    %v179 = vsub.f32 1.0, %v178
    %v180 = vmul.f32 %v177, %v179
    %v181 = vadd.f32 %v177, %v180
    %vm182 = vweird.f32 %v174
    %vm183 = vweird.f32 %v177
    %vm184 = vmor %vm182, %vm183
    %v185 = vsel %vm184, %v177, %v181
    %v186 = vand.u32 2147483647, %v174
    %vm187 = vcmp.eq.f32.partialorder %v186, 8.507059e+37
    %v188 = vand.u32 %v174, 2147483648
    %v189 = vor.u32 1.1754944e-38, %v188
    %v190 = vsel %vm187, %v189, %v185
    %v191 = vmul.f32 1.0, %v190
    %v192 = vrcp.pop %v175
    %v193 = vmul.f32 %v175, %v192
    %v194 = vsub.f32 1.0, %v193
    %v195 = vmul.f32 %v192, %v194
    %v196 = vadd.f32 %v192, %v195
    %vm197 = vweird.f32 %v175
    %vm198 = vweird.f32 %v192
    %vm199 = vmor %vm197, %vm198
    %v200 = vsel %vm199, %v192, %v196
    %v201 = vand.u32 2147483647, %v175
    %vm202 = vcmp.eq.f32.partialorder %v201, 8.507059e+37
    %v203 = vand.u32 %v175, 2147483648
    %v204 = vor.u32 1.1754944e-38, %v203
    %v205 = vsel %vm202, %v204, %v200
    %v206 = vmul.f32 1.0, %v205
    %v207 = vrcp.pop %v176
    %v208 = vmul.f32 %v176, %v207
    %v209 = vsub.f32 1.0, %v208
    %v210 = vmul.f32 %v207, %v209
    %v211 = vadd.f32 %v207, %v210
    %vm212 = vweird.f32 %v176
    %vm213 = vweird.f32 %v207
    %vm214 = vmor %vm212, %vm213
    %v215 = vsel %vm214, %v207, %v211
    %v216 = vand.u32 2147483647, %v176
    %vm217 = vcmp.eq.f32.partialorder %v216, 8.507059e+37
    %v218 = vand.u32 %v176, 2147483648
    %v219 = vor.u32 1.1754944e-38, %v218
    %v220 = vsel %vm217, %v219, %v215
    %v221 = vmul.f32 1.0, %v220
    %v222 = vmul.f32 %v157, %v191
    %v223 = vmul.f32 %v159, %v206
    %v224 = vmul.f32 %v162, %v221
    %v225 = vpack.c.bf16 %v223, %v222
    %v226 = vpack.c.bf16 %v224, %v224
    %v227 = vld [vmem:[#allocation7] sm:$0xf]
    %v228 = vld [vmem:[#allocation7 + $0x4] sm:$0xf]
    %v229 = vld [vmem:[#allocation7 + $0x8] sm:$0xf]
    %v230 = vld [vmem:[#allocation7 + $0xc] sm:$0xf]
    %v231 = vld [vmem:[#allocation7 + $0x10] sm:$0xf]
    %v232 = vld [vmem:[#allocation7 + $0x14] sm:$0xf]
    %v233 = vld [vmem:[#allocation7 + $0x18] sm:$0xf]
    %v234 = vld [vmem:[#allocation7 + $0x1c] sm:$0xf]
    %v235 = vld [vmem:[#allocation7 + $0x20] sm:$0xf]
    %v236 = vld [vmem:[#allocation7 + $0x24] sm:$0xf]
    %v237 = vld [vmem:[#allocation7 + $0x28] sm:$0xf]
    %v238 = vld [vmem:[#allocation7 + $0x2c] sm:$0xf]
    %v239 = vld [vmem:[#allocation7 + $0x30] sm:$0xf]
    %v240 = vld [vmem:[#allocation7 + $0x34] sm:$0xf]
    %v241 = vld [vmem:[#allocation7 + $0x38] sm:$0xf]
    %v242 = vld [vmem:[#allocation7 + $0x3c] sm:$0xf]
    %v243 = vperm.slane %v69, 0
    %v260 = vunpack.c.l.b16 %v227
    %v261 = vunpack.c.l.b16 %v228
    %v262 = vunpack.c.l.b16 %v229
    %v263 = vunpack.c.l.b16 %v230
    %v264 = vunpack.c.l.b16 %v231
    %v265 = vunpack.c.l.b16 %v232
    %v266 = vunpack.c.l.b16 %v233
    %v267 = vunpack.c.l.b16 %v234
    %v268 = vunpack.c.l.b16 %v235
    %v269 = vunpack.c.l.b16 %v236
    %v270 = vunpack.c.l.b16 %v237
    %v271 = vunpack.c.l.b16 %v238
    %v272 = vunpack.c.l.b16 %v239
    %v273 = vunpack.c.l.b16 %v240
    %v274 = vunpack.c.l.b16 %v241
    %v275 = vunpack.c.l.b16 %v242
    %v276 = vpack.c.b16 %v261, %v260
    %v277 = vpack.c.b16 %v263, %v262
    %v278 = vpack.c.b16 %v265, %v264
    %v279 = vpack.c.b16 %v267, %v266
    %v280 = vpack.c.b16 %v269, %v268
    %v281 = vpack.c.b16 %v271, %v270
    %v282 = vpack.c.b16 %v273, %v272
    %v283 = vpack.c.b16 %v275, %v274
    %292 = vmatpush.bf16.msra.mxu0 %v283
    %293 = vmatpush.bf16.msra.mxu0 %v282
    %294 = vmatpush.bf16.msra.mxu0 %v281
    %295 = vmatpush.bf16.msra.mxu0 %v280
    %296 = vmatpush.bf16.msra.mxu0 %v279
    %297 = vmatpush.bf16.msra.mxu0 %v278
    %298 = vmatpush.bf16.msra.mxu0 %v277
    %299 = vmatpush.bf16.msra.mxu0 %v276
    %300 = vmatmul.bf16.gmra.mxu0 %v225
    %v301 = vpop.f32.mrf.mxu0
    %v302 = vadd.f32 %v243, %v301
    %v303 = vpop.f32.mrf.mxu0
    %v304 = vadd.f32 %v243, %v303
    %305 = vmatmul.bf16.gmra.mxu0 %v226
    %v306 = vpop.f32.mrf.mxu0
    %v307 = vadd.f32 %v243, %v306
    %v308 = vpop.f32.mrf.mxu0
    %309 = vdwg.mxu0
    %310 = vadd.xlane.f32.xlu0 %v302
    %v311 = vpop.xlane.xlu0 %310
    %312 = vadd.xlane.f32.xlu0 %v304
    %v313 = vpop.xlane.xlu0 %312
    %314 = vadd.xlane.f32.xlu0 %v307
    %v315 = vpop.xlane.xlu0 %314
    %v316 = vrcp.pop 128.0
    %v317 = vmul.f32 128.0, %v316
    %v318 = vsub.f32 1.0, %v317
    %v319 = vmul.f32 %v316, %v318
    %v320 = vadd.f32 %v316, %v319
    %vm321 = vweird.f32 %v316
    %v322 = vsel %vm321, %v316, %v320
    %v323 = vmul.f32 %v311, %v322
    %v324 = vmul.f32 %v313, %v322
    %v325 = vmul.f32 %v315, %v322
    %v326 = vsub.f32 %v302, %v323
    %v327 = vsub.f32 %v304, %v324
    %v328 = vsub.f32 %v307, %v325
    %v329 = vmul.f32 %v326, %v326
    %v330 = vmul.f32 %v327, %v327
    %v331 = vmul.f32 %v328, %v328
    %332 = vadd.xlane.f32.xlu0 %v329
    %v333 = vpop.xlane.xlu0 %332
    %334 = vadd.xlane.f32.xlu0 %v330
    %v335 = vpop.xlane.xlu0 %334
    %336 = vadd.xlane.f32.xlu0 %v331
    %v337 = vpop.xlane.xlu0 %336
    %v338 = vmul.f32 %v333, %v322
    %v339 = vmul.f32 %v335, %v322
    %v340 = vmul.f32 %v337, %v322
    %v341 = vadd.f32 %v338, 1e-05
    %v342 = vadd.f32 %v339, 1e-05
    %v343 = vadd.f32 %v340, 1e-05
    %v344 = vrsqrt.pop %v341
    %v345 = vmul.f32 %v344, %v341
    %v346 = vmul.f32 %v345, %v344
    %v347 = vmul.f32 0.5, %v346
    %v348 = vsub.f32 1.5, %v347
    %v349 = vmul.f32 %v344, %v348
    %vm350 = vweird.f32 %v341
    %vm351 = vweird.f32 %v344
    %vm352 = vmor %vm350, %vm351
    %v353 = vsel %vm352, %v344, %v349
    %v354 = vrsqrt.pop %v342
    %v355 = vmul.f32 %v354, %v342
    %v356 = vmul.f32 %v355, %v354
    %v357 = vmul.f32 0.5, %v356
    %v358 = vsub.f32 1.5, %v357
    %v359 = vmul.f32 %v354, %v358
    %vm360 = vweird.f32 %v342
    %vm361 = vweird.f32 %v354
    %vm362 = vmor %vm360, %vm361
    %v363 = vsel %vm362, %v354, %v359
    %v364 = vrsqrt.pop %v343
    %v365 = vmul.f32 %v364, %v343
    %v366 = vmul.f32 %v365, %v364
    %v367 = vmul.f32 0.5, %v366
    %v368 = vsub.f32 1.5, %v367
    %v369 = vmul.f32 %v364, %v368
    %vm370 = vweird.f32 %v343
    %vm371 = vweird.f32 %v364
    %vm372 = vmor %vm370, %vm371
    %v373 = vsel %vm372, %v364, %v369
    %v374 = vmul.f32 %v326, %v353
    %v375 = vmul.f32 %v327, %v363
    %v376 = vmul.f32 %v328, %v373
    %v377 = vperm.slane %v70, 0
    %v378 = vmul.f32 %v374, %v377
    %v379 = vmul.f32 %v375, %v377
    %v380 = vmul.f32 %v376, %v377
    %v381 = vperm.slane %v71, 0
    %v382 = vadd.f32 %v378, %v381
    %v383 = vadd.f32 %v379, %v381
    %v384 = vadd.f32 %v380, %v381
    %v385 = vpack.c.bf16 %v382, %v382
    %v386 = vpack.c.bf16 %v383, %v383
    %v387 = vpack.c.bf16 %v384, %v384
    %388 = vst [vmem:[#allocation8] sm:$0xf] %v385
    %389 = vst [vmem:[#allocation8 + $0x4] sm:$0xf] %v386
    %390 = vst [vmem:[#allocation8 + $0x8] sm:$0xf] %v387
    // Predicated region
    $region30: #{encoder_generic_forward.5} parent=1 // pred_check
      _
    $region31: #{encoder_generic_forward.5} parent=1 // pred_check_branch
      %392 = sbr.rel (0) target = $region33
    $region32: #{encoder_generic_forward.5} parent=1 // pred_region
      %394 = vsyncadd [#allocation4], 0
      %s395 = sshll.u32 [#allocation8], 4
      %s396 = int_to_ptr.vmem [resolvable:$true] %s395
      %s397 = sshll.u32 %s4, 4
      %s398 = int_to_ptr.hbm [resolvable:$true] %s397
      %403 = dma.vmem_to_hbm [thread:$0]  %s396, 192, %s398, [#allocation4], 64, 64, 4
    $region33: #{encoder_generic_forward.5} parent=1 // pred_fallthru
      _
    // Predicated region
    $region34: #{encoder_generic_forward.5} parent=1 // pred_check
      _
    $region35: #{encoder_generic_forward.5} parent=1 // pred_check_branch
      %405 = sbr.rel (0) target = $region37
    $region36: #{encoder_generic_forward.5} parent=1 // pred_region
      %407 = dma.done [#allocation4], 192
    $region37: #{encoder_generic_forward.5} parent=1 // pred_fallthru
      _
    %408 = vsyncpa [#allocation3], 1
    %409 = vsyncpa [#allocation6], 1
    %410 = vsyncpa [#allocation4], 1

// kernel: encoder_generic_forward.4
$region0: #{encoder_generic_forward.4}
  #allocation0 [shape = 'u32[]', space=smem, size = 0x4, offset = 0x4, fixed_abs, tag = 'smem constant byte address 0x4 - core index']
  #allocation1 [shape = 'u32[72,128]{1,0:T(1,128)}', space=vmem, size = 0x9000, scoped, tag = 'internal scratch']
  %s0 = inlined_call_operand.hbm [shape: bf16[32,128], index: 0, kind: input, shape index: {}]
  %s1 = inlined_call_operand.hbm [shape: bf16[128,128], index: 1, kind: input, shape index: {}]
  %s2 = inlined_call_operand.hbm [shape: bf16[128,128], index: 2, kind: input, shape index: {}]
  %s3 = inlined_call_operand.hbm [shape: f32[8,128], index: 3, kind: input, shape index: {}]
  %s4 = inlined_call_operand.hbm [shape: bf16[32,128], index: 4, kind: output, shape index: {}]
  %s5 = sld [smem:[#allocation0]]
  $region42: #{encoder_generic_forward.4} parent=0
    _
  %s7 = ssub.s32 1, %s5
  %s8 = scalar_select 0, %s7, %s5
  $region1: #{encoder_generic_forward.4} parent=0
    #allocation2 [shape = 'u8[8192]{0}', space=vmem, size = 0x2000, scoped, tag = 'input window, operand 0, single buffered']
    #allocation3 [shape = 's32[1]{0}', space=sflag, size = 0x4, scoped, tag = 'scoped memory for encoder_generic_forward.4']
    #allocation4 [shape = 's32[1]{0}', space=sflag, size = 0x4, scoped, tag = 'scoped memory for encoder_generic_forward.4']
    #allocation5 [shape = 'u8[32768]{0}', space=vmem, size = 0x8000, scoped, tag = 'input window, operand 1, single buffered']
    #allocation6 [shape = 's32[1]{0}', space=sflag, size = 0x4, scoped, tag = 'scoped memory for encoder_generic_forward.4']
    #allocation7 [shape = 'u8[32768]{0}', space=vmem, size = 0x8000, scoped, tag = 'input window, operand 2, single buffered']
    #allocation8 [shape = 'u8[4096]{0}', space=vmem, size = 0x1000, scoped, tag = 'input window, operand 3, single buffered']
    #allocation9 [shape = 's32[1]{0}', space=sflag, size = 0x4, scoped, tag = 'scoped memory for encoder_generic_forward.4']
    #allocation10 [shape = 'u8[8192]{0}', space=vmem, size = 0x2000, scoped, tag = 'output window, operand 0, single buffered']
    %9 = vsyncpa [#allocation3], 0
    %10 = vsyncpa [#allocation6], 0
    %11 = vsyncpa [#allocation9], 0
    %12 = vsyncpa [#allocation4], 0
    // Predicated region
    $region2: #{encoder_generic_forward.4} parent=1 // pred_check
      _
    $region3: #{encoder_generic_forward.4} parent=1 // pred_check_branch
      %14 = sbr.rel (0) target = $region5
    $region4: #{encoder_generic_forward.4} parent=1 // pred_region
      %16 = vsyncadd [#allocation3], 0
      %s17 = sshll.u32 %s0, 4
      %s18 = int_to_ptr.hbm [resolvable:$true] %s17
      %s19 = sshll.u32 [#allocation2], 4
      %s20 = int_to_ptr.vmem [resolvable:$true] %s19
      %25 = dma.hbm_to_vmem [thread:$0]  %s18, 256, %s20, [#allocation3], 64, 64, 4
    $region5: #{encoder_generic_forward.4} parent=1 // pred_fallthru
      _
    // Predicated region
    $region6: #{encoder_generic_forward.4} parent=1 // pred_check
      _
    $region7: #{encoder_generic_forward.4} parent=1 // pred_check_branch
      %27 = sbr.rel (0) target = $region9
    $region8: #{encoder_generic_forward.4} parent=1 // pred_region
      %29 = vsyncadd [#allocation6], 0
      %s30 = sshll.u32 %s1, 4
      %s31 = int_to_ptr.hbm [resolvable:$true] %s30
      %s32 = sshll.u32 [#allocation5], 4
      %s33 = int_to_ptr.vmem [resolvable:$true] %s32
      %38 = dma.hbm_to_vmem [thread:$0]  %s31, 1024, %s33, [#allocation6], 64, 64, 4
    $region9: #{encoder_generic_forward.4} parent=1 // pred_fallthru
      _
    // Predicated region
    $region10: #{encoder_generic_forward.4} parent=1 // pred_check
      _
    $region11: #{encoder_generic_forward.4} parent=1 // pred_check_branch
      %40 = sbr.rel (0) target = $region13
    $region12: #{encoder_generic_forward.4} parent=1 // pred_region
      %42 = vsyncadd [#allocation6], 0
      %s43 = sshll.u32 %s2, 4
      %s44 = int_to_ptr.hbm [resolvable:$true] %s43
      %s45 = sshll.u32 [#allocation7], 4
      %s46 = int_to_ptr.vmem [resolvable:$true] %s45
      %51 = dma.hbm_to_vmem [thread:$0]  %s44, 1024, %s46, [#allocation6], 64, 64, 4
    $region13: #{encoder_generic_forward.4} parent=1 // pred_fallthru
      _
    // Predicated region
    $region14: #{encoder_generic_forward.4} parent=1 // pred_check
      _
    $region15: #{encoder_generic_forward.4} parent=1 // pred_check_branch
      %53 = sbr.rel (0) target = $region17
    $region16: #{encoder_generic_forward.4} parent=1 // pred_region
      %55 = vsyncadd [#allocation9], 0
      %s57 = sshll.u32 %s3, 4
      %s58 = int_to_ptr.hbm [resolvable:$true] %s57
      %s59 = sshll.u32 [#allocation8], 4
      %s60 = int_to_ptr.vmem [resolvable:$true] %s59
      %62 = dma.hbm_to_vmem [thread:$0]  %s58, 128, %s60, [#allocation9]
    $region17: #{encoder_generic_forward.4} parent=1 // pred_fallthru
      _
    // Predicated region
    $region18: #{encoder_generic_forward.4} parent=1 // pred_check
      _
    $region19: #{encoder_generic_forward.4} parent=1 // pred_check_branch
      %64 = sbr.rel (0) target = $region21
    $region20: #{encoder_generic_forward.4} parent=1 // pred_region
      %66 = dma.done [#allocation3], 256
    $region21: #{encoder_generic_forward.4} parent=1 // pred_fallthru
      _
    // Predicated region
    $region22: #{encoder_generic_forward.4} parent=1 // pred_check
      _
    $region23: #{encoder_generic_forward.4} parent=1 // pred_check_branch
      %68 = sbr.rel (0) target = $region25
    $region24: #{encoder_generic_forward.4} parent=1 // pred_region
      %70 = dma.done [#allocation6], 1024
    $region25: #{encoder_generic_forward.4} parent=1 // pred_fallthru
      _
    // Predicated region
    $region26: #{encoder_generic_forward.4} parent=1 // pred_check
      _
    $region27: #{encoder_generic_forward.4} parent=1 // pred_check_branch
      %72 = sbr.rel (0) target = $region29
    $region28: #{encoder_generic_forward.4} parent=1 // pred_region
      %74 = dma.done [#allocation6], 1024
    $region29: #{encoder_generic_forward.4} parent=1 // pred_fallthru
      _
    // Predicated region
    $region30: #{encoder_generic_forward.4} parent=1 // pred_check
      _
    $region31: #{encoder_generic_forward.4} parent=1 // pred_check_branch
      %76 = sbr.rel (0) target = $region33
    $region32: #{encoder_generic_forward.4} parent=1 // pred_region
      %78 = dma.done [#allocation9], 128
    $region33: #{encoder_generic_forward.4} parent=1 // pred_fallthru
      _
    %v79 = vld [vmem:[#allocation2] sm:$0xf]
    %v80 = vld [vmem:[#allocation2 + $0x4] sm:$0xf]
    %v81 = vld [vmem:[#allocation2 + $0x8] sm:$0xf]
    %v82 = vld [vmem:[#allocation2 + $0xc] sm:$0xf]
    %v83 = vld [vmem:[#allocation8] sm:$0x1]
    %v84 = vld [vmem:[#allocation8 + $0x1] sm:$0x1]
    %v85 = vld [vmem:[#allocation8 + $0x2] sm:$0x1]
    %v86 = vld [vmem:[#allocation8 + $0x3] sm:$0x1]
    %v87 = vld [vmem:[#allocation5] sm:$0xf]
    %v88 = vld [vmem:[#allocation5 + $0x4] sm:$0xf]
    %v89 = vld [vmem:[#allocation5 + $0x8] sm:$0xf]
    %v90 = vld [vmem:[#allocation5 + $0xc] sm:$0xf]
    %v91 = vld [vmem:[#allocation5 + $0x10] sm:$0xf]
    %v92 = vld [vmem:[#allocation5 + $0x14] sm:$0xf]
    %v93 = vld [vmem:[#allocation5 + $0x18] sm:$0xf]
    %v94 = vld [vmem:[#allocation5 + $0x1c] sm:$0xf]
    %v95 = vld [vmem:[#allocation5 + $0x20] sm:$0xf]
    %v96 = vld [vmem:[#allocation5 + $0x24] sm:$0xf]
    %v97 = vld [vmem:[#allocation5 + $0x28] sm:$0xf]
    %v98 = vld [vmem:[#allocation5 + $0x2c] sm:$0xf]
    %v99 = vld [vmem:[#allocation5 + $0x30] sm:$0xf]
    %v100 = vld [vmem:[#allocation5 + $0x34] sm:$0xf]
    %v101 = vld [vmem:[#allocation5 + $0x38] sm:$0xf]
    %v102 = vld [vmem:[#allocation5 + $0x3c] sm:$0xf]
    %v103 = vperm.slane %v83, 0
    %v108 = vunpack.c.l.b16 %v79
    %v109 = vunpack.c.l.b16 %v80
    %v110 = vunpack.c.l.b16 %v81
    %v111 = vunpack.c.l.b16 %v82
    %v112 = vpack.c.b16 %v109, %v108
    %v113 = vpack.c.b16 %v111, %v110
    %v132 = vunpack.c.l.b16 %v87
    %v133 = vunpack.c.l.b16 %v88
    %v134 = vunpack.c.l.b16 %v89
    %v135 = vunpack.c.l.b16 %v90
    %v136 = vunpack.c.l.b16 %v91
    %v137 = vunpack.c.l.b16 %v92
    %v138 = vunpack.c.l.b16 %v93
    %v139 = vunpack.c.l.b16 %v94
    %v140 = vunpack.c.l.b16 %v95
    %v141 = vunpack.c.l.b16 %v96
    %v142 = vunpack.c.l.b16 %v97
    %v143 = vunpack.c.l.b16 %v98
    %v144 = vunpack.c.l.b16 %v99
    %v145 = vunpack.c.l.b16 %v100
    %v146 = vunpack.c.l.b16 %v101
    %v147 = vunpack.c.l.b16 %v102
    %v148 = vpack.c.b16 %v133, %v132
    %v149 = vpack.c.b16 %v135, %v134
    %v150 = vpack.c.b16 %v137, %v136
    %v151 = vpack.c.b16 %v139, %v138
    %v152 = vpack.c.b16 %v141, %v140
    %v153 = vpack.c.b16 %v143, %v142
    %v154 = vpack.c.b16 %v145, %v144
    %v155 = vpack.c.b16 %v147, %v146
    %164 = vmatpush.bf16.msra.mxu0 %v155
    %165 = vmatpush.bf16.msra.mxu0 %v154
    %166 = vmatpush.bf16.msra.mxu0 %v153
    %167 = vmatpush.bf16.msra.mxu0 %v152
    %168 = vmatpush.bf16.msra.mxu0 %v151
    %169 = vmatpush.bf16.msra.mxu0 %v150
    %170 = vmatpush.bf16.msra.mxu0 %v149
    %171 = vmatpush.bf16.msra.mxu0 %v148
    %172 = vmatmul.bf16.gmra.mxu0 %v112
    %v173 = vpop.f32.mrf.mxu0
    %v174 = vadd.f32 %v103, %v173
    %v175 = vpop.f32.mrf.mxu0
    %v176 = vadd.f32 %v103, %v175
    %177 = vmatmul.bf16.gmra.mxu0 %v113
    %v178 = vpop.f32.mrf.mxu0
    %v179 = vadd.f32 %v103, %v178
    %v180 = vpop.f32.mrf.mxu0
    %v181 = vadd.f32 %v103, %v180
    %182 = vdwg.mxu0
    %v183 = vxor.u32 %v174, 2147483648
    %v184 = vxor.u32 %v176, 2147483648
    %v185 = vxor.u32 %v179, 2147483648
    %v186 = vxor.u32 %v181, 2147483648
    %v187 = vmul.f32 %v183, 1.442695
    %v188 = vpow.pop %v187
    %v189 = vmul.f32 %v184, 1.442695
    %v190 = vpow.pop %v189
    %v191 = vmul.f32 %v185, 1.442695
    %v192 = vpow.pop %v191
    %v193 = vmul.f32 %v186, 1.442695
    %v194 = vpow.pop %v193
    %v195 = vadd.f32 %v188, 1.0
    %v196 = vadd.f32 %v190, 1.0
    %v197 = vadd.f32 %v192, 1.0
    %v198 = vadd.f32 %v194, 1.0
    %v199 = vrcp.pop %v195
    %v200 = vmul.f32 %v195, %v199
    %v201 = vsub.f32 1.0, %v200
    %v202 = vmul.f32 %v199, %v201
    %v203 = vadd.f32 %v199, %v202
    %vm204 = vweird.f32 %v195
    %vm205 = vweird.f32 %v199
    %vm206 = vmor %vm204, %vm205
    %v207 = vsel %vm206, %v199, %v203
    %v208 = vand.u32 2147483647, %v195
    %vm209 = vcmp.eq.f32.partialorder %v208, 8.507059e+37
    %v210 = vand.u32 %v195, 2147483648
    %v211 = vor.u32 1.1754944e-38, %v210
    %v212 = vsel %vm209, %v211, %v207
    %v213 = vmul.f32 1.0, %v212
    %v214 = vrcp.pop %v196
    %v215 = vmul.f32 %v196, %v214
    %v216 = vsub.f32 1.0, %v215
    %v217 = vmul.f32 %v214, %v216
    %v218 = vadd.f32 %v214, %v217
    %vm219 = vweird.f32 %v196
    %vm220 = vweird.f32 %v214
    %vm221 = vmor %vm219, %vm220
    %v222 = vsel %vm221, %v214, %v218
    %v223 = vand.u32 2147483647, %v196
    %vm224 = vcmp.eq.f32.partialorder %v223, 8.507059e+37
    %v225 = vand.u32 %v196, 2147483648
    %v226 = vor.u32 1.1754944e-38, %v225
    %v227 = vsel %vm224, %v226, %v222
    %v228 = vmul.f32 1.0, %v227
    %v229 = vrcp.pop %v197
    %v230 = vmul.f32 %v197, %v229
    %v231 = vsub.f32 1.0, %v230
    %v232 = vmul.f32 %v229, %v231
    %v233 = vadd.f32 %v229, %v232
    %vm234 = vweird.f32 %v197
    %vm235 = vweird.f32 %v229
    %vm236 = vmor %vm234, %vm235
    %v237 = vsel %vm236, %v229, %v233
    %v238 = vand.u32 2147483647, %v197
    %vm239 = vcmp.eq.f32.partialorder %v238, 8.507059e+37
    %v240 = vand.u32 %v197, 2147483648
    %v241 = vor.u32 1.1754944e-38, %v240
    %v242 = vsel %vm239, %v241, %v237
    %v243 = vmul.f32 1.0, %v242
    %v244 = vrcp.pop %v198
    %v245 = vmul.f32 %v198, %v244
    %v246 = vsub.f32 1.0, %v245
    %v247 = vmul.f32 %v244, %v246
    %v248 = vadd.f32 %v244, %v247
    %vm249 = vweird.f32 %v198
    %vm250 = vweird.f32 %v244
    %vm251 = vmor %vm249, %vm250
    %v252 = vsel %vm251, %v244, %v248
    %v253 = vand.u32 2147483647, %v198
    %vm254 = vcmp.eq.f32.partialorder %v253, 8.507059e+37
    %v255 = vand.u32 %v198, 2147483648
    %v256 = vor.u32 1.1754944e-38, %v255
    %v257 = vsel %vm254, %v256, %v252
    %v258 = vmul.f32 1.0, %v257
    %v259 = vmul.f32 %v174, %v213
    %v260 = vmul.f32 %v176, %v228
    %v261 = vmul.f32 %v179, %v243
    %v262 = vmul.f32 %v181, %v258
    %v263 = vpack.c.bf16 %v260, %v259
    %v264 = vpack.c.bf16 %v262, %v261
    %v265 = vld [vmem:[#allocation7] sm:$0xf]
    %v266 = vld [vmem:[#allocation7 + $0x4] sm:$0xf]
    %v267 = vld [vmem:[#allocation7 + $0x8] sm:$0xf]
    %v268 = vld [vmem:[#allocation7 + $0xc] sm:$0xf]
    %v269 = vld [vmem:[#allocation7 + $0x10] sm:$0xf]
    %v270 = vld [vmem:[#allocation7 + $0x14] sm:$0xf]
    %v271 = vld [vmem:[#allocation7 + $0x18] sm:$0xf]
    %v272 = vld [vmem:[#allocation7 + $0x1c] sm:$0xf]
    %v273 = vld [vmem:[#allocation7 + $0x20] sm:$0xf]
    %v274 = vld [vmem:[#allocation7 + $0x24] sm:$0xf]
    %v275 = vld [vmem:[#allocation7 + $0x28] sm:$0xf]
    %v276 = vld [vmem:[#allocation7 + $0x2c] sm:$0xf]
    %v277 = vld [vmem:[#allocation7 + $0x30] sm:$0xf]
    %v278 = vld [vmem:[#allocation7 + $0x34] sm:$0xf]
    %v279 = vld [vmem:[#allocation7 + $0x38] sm:$0xf]
    %v280 = vld [vmem:[#allocation7 + $0x3c] sm:$0xf]
    %v281 = vperm.slane %v84, 0
    %v298 = vunpack.c.l.b16 %v265
    %v299 = vunpack.c.l.b16 %v266
    %v300 = vunpack.c.l.b16 %v267
    %v301 = vunpack.c.l.b16 %v268
    %v302 = vunpack.c.l.b16 %v269
    %v303 = vunpack.c.l.b16 %v270
    %v304 = vunpack.c.l.b16 %v271
    %v305 = vunpack.c.l.b16 %v272
    %v306 = vunpack.c.l.b16 %v273
    %v307 = vunpack.c.l.b16 %v274
    %v308 = vunpack.c.l.b16 %v275
    %v309 = vunpack.c.l.b16 %v276
    %v310 = vunpack.c.l.b16 %v277
    %v311 = vunpack.c.l.b16 %v278
    %v312 = vunpack.c.l.b16 %v279
    %v313 = vunpack.c.l.b16 %v280
    %v314 = vpack.c.b16 %v299, %v298
    %v315 = vpack.c.b16 %v301, %v300
    %v316 = vpack.c.b16 %v303, %v302
    %v317 = vpack.c.b16 %v305, %v304
    %v318 = vpack.c.b16 %v307, %v306
    %v319 = vpack.c.b16 %v309, %v308
    %v320 = vpack.c.b16 %v311, %v310
    %v321 = vpack.c.b16 %v313, %v312
    %330 = vmatpush.bf16.msra.mxu0 %v321
    %331 = vmatpush.bf16.msra.mxu0 %v320
    %332 = vmatpush.bf16.msra.mxu0 %v319
    %333 = vmatpush.bf16.msra.mxu0 %v318
    %334 = vmatpush.bf16.msra.mxu0 %v317
    %335 = vmatpush.bf16.msra.mxu0 %v316
    %336 = vmatpush.bf16.msra.mxu0 %v315
    %337 = vmatpush.bf16.msra.mxu0 %v314
    %338 = vmatmul.bf16.gmra.mxu0 %v263
    %v339 = vpop.f32.mrf.mxu0
    %v340 = vadd.f32 %v281, %v339
    %v341 = vpop.f32.mrf.mxu0
    %v342 = vadd.f32 %v281, %v341
    %343 = vmatmul.bf16.gmra.mxu0 %v264
    %v344 = vpop.f32.mrf.mxu0
    %v345 = vadd.f32 %v281, %v344
    %v346 = vpop.f32.mrf.mxu0
    %v347 = vadd.f32 %v281, %v346
    %348 = vdwg.mxu0
    %349 = vadd.xlane.f32.xlu0 %v340
    %v350 = vpop.xlane.xlu0 %349
    %351 = vadd.xlane.f32.xlu0 %v342
    %v352 = vpop.xlane.xlu0 %351
    %353 = vadd.xlane.f32.xlu0 %v345
    %v354 = vpop.xlane.xlu0 %353
    %355 = vadd.xlane.f32.xlu0 %v347
    %v356 = vpop.xlane.xlu0 %355
    %v357 = vrcp.pop 128.0
    %v358 = vmul.f32 128.0, %v357
    %v359 = vsub.f32 1.0, %v358
    %v360 = vmul.f32 %v357, %v359
    %v361 = vadd.f32 %v357, %v360
    %vm362 = vweird.f32 %v357
    %v363 = vsel %vm362, %v357, %v361
    %v364 = vmul.f32 %v350, %v363
    %v365 = vmul.f32 %v352, %v363
    %v366 = vmul.f32 %v354, %v363
    %v367 = vmul.f32 %v356, %v363
    %v368 = vsub.f32 %v340, %v364
    %v369 = vsub.f32 %v342, %v365
    %v370 = vsub.f32 %v345, %v366
    %v371 = vsub.f32 %v347, %v367
    %v372 = vmul.f32 %v368, %v368
    %v373 = vmul.f32 %v369, %v369
    %v374 = vmul.f32 %v370, %v370
    %v375 = vmul.f32 %v371, %v371
    %376 = vadd.xlane.f32.xlu0 %v372
    %v377 = vpop.xlane.xlu0 %376
    %378 = vadd.xlane.f32.xlu0 %v373
    %v379 = vpop.xlane.xlu0 %378
    %380 = vadd.xlane.f32.xlu0 %v374
    %v381 = vpop.xlane.xlu0 %380
    %382 = vadd.xlane.f32.xlu0 %v375
    %v383 = vpop.xlane.xlu0 %382
    %v384 = vmul.f32 %v377, %v363
    %v385 = vmul.f32 %v379, %v363
    %v386 = vmul.f32 %v381, %v363
    %v387 = vmul.f32 %v383, %v363
    %v388 = vadd.f32 %v384, 1e-05
    %v389 = vadd.f32 %v385, 1e-05
    %v390 = vadd.f32 %v386, 1e-05
    %v391 = vadd.f32 %v387, 1e-05
    %v392 = vrsqrt.pop %v388
    %v393 = vmul.f32 %v392, %v388
    %v394 = vmul.f32 %v393, %v392
    %v395 = vmul.f32 0.5, %v394
    %v396 = vsub.f32 1.5, %v395
    %v397 = vmul.f32 %v392, %v396
    %vm398 = vweird.f32 %v388
    %vm399 = vweird.f32 %v392
    %vm400 = vmor %vm398, %vm399
    %v401 = vsel %vm400, %v392, %v397
    %v402 = vrsqrt.pop %v389
    %v403 = vmul.f32 %v402, %v389
    %v404 = vmul.f32 %v403, %v402
    %v405 = vmul.f32 0.5, %v404
    %v406 = vsub.f32 1.5, %v405
    %v407 = vmul.f32 %v402, %v406
    %vm408 = vweird.f32 %v389
    %vm409 = vweird.f32 %v402
    %vm410 = vmor %vm408, %vm409
    %v411 = vsel %vm410, %v402, %v407
    %v412 = vrsqrt.pop %v390
    %v413 = vmul.f32 %v412, %v390
    %v414 = vmul.f32 %v413, %v412
    %v415 = vmul.f32 0.5, %v414
    %v416 = vsub.f32 1.5, %v415
    %v417 = vmul.f32 %v412, %v416
    %vm418 = vweird.f32 %v390
    %vm419 = vweird.f32 %v412
    %vm420 = vmor %vm418, %vm419
    %v421 = vsel %vm420, %v412, %v417
    %v422 = vrsqrt.pop %v391
    %v423 = vmul.f32 %v422, %v391
    %v424 = vmul.f32 %v423, %v422
    %v425 = vmul.f32 0.5, %v424
    %v426 = vsub.f32 1.5, %v425
    %v427 = vmul.f32 %v422, %v426
    %vm428 = vweird.f32 %v391
    %vm429 = vweird.f32 %v422
    %vm430 = vmor %vm428, %vm429
    %v431 = vsel %vm430, %v422, %v427
    %v432 = vmul.f32 %v368, %v401
    %v433 = vmul.f32 %v369, %v411
    %v434 = vmul.f32 %v370, %v421
    %v435 = vmul.f32 %v371, %v431
    %v436 = vperm.slane %v85, 0
    %v437 = vmul.f32 %v432, %v436
    %v438 = vmul.f32 %v433, %v436
    %v439 = vmul.f32 %v434, %v436
    %v440 = vmul.f32 %v435, %v436
    %v441 = vperm.slane %v86, 0
    %v442 = vadd.f32 %v437, %v441
    %v443 = vadd.f32 %v438, %v441
    %v444 = vadd.f32 %v439, %v441
    %v445 = vadd.f32 %v440, %v441
    %v446 = vpack.c.bf16 %v442, %v442
    %v447 = vpack.c.bf16 %v443, %v443
    %v448 = vpack.c.bf16 %v444, %v444
    %v449 = vpack.c.bf16 %v445, %v445
    %450 = vst [vmem:[#allocation10] sm:$0xf] %v446
    %451 = vst [vmem:[#allocation10 + $0x4] sm:$0xf] %v447
    %452 = vst [vmem:[#allocation10 + $0x8] sm:$0xf] %v448
    %453 = vst [vmem:[#allocation10 + $0xc] sm:$0xf] %v449
    // Predicated region
    $region34: #{encoder_generic_forward.4} parent=1 // pred_check
      _
    $region35: #{encoder_generic_forward.4} parent=1 // pred_check_branch
      %455 = sbr.rel (0) target = $region37
    $region36: #{encoder_generic_forward.4} parent=1 // pred_region
      %457 = vsyncadd [#allocation4], 0
      %s458 = sshll.u32 [#allocation10], 4
      %s459 = int_to_ptr.vmem [resolvable:$true] %s458
      %s460 = sshll.u32 %s4, 4
      %s461 = int_to_ptr.hbm [resolvable:$true] %s460
      %466 = dma.vmem_to_hbm [thread:$0]  %s459, 256, %s461, [#allocation4], 64, 64, 4
    $region37: #{encoder_generic_forward.4} parent=1 // pred_fallthru
      _
    // Predicated region
    $region38: #{encoder_generic_forward.4} parent=1 // pred_check
      _
    $region39: #{encoder_generic_forward.4} parent=1 // pred_check_branch
      %468 = sbr.rel (0) target = $region41
    $region40: #{encoder_generic_forward.4} parent=1 // pred_region
      %470 = dma.done [#allocation4], 256
    $region41: #{encoder_generic_forward.4} parent=1 // pred_fallthru
      _
    %471 = vsyncpa [#allocation3], 1
    %472 = vsyncpa [#allocation6], 1
    %473 = vsyncpa [#allocation9], 1
    %474 = vsyncpa [#allocation4], 1

</llo_original>
